<compile_context>
chip_gen: v7x
topology: tpu7x:2x2x1
jax: 0.10.0
libtpu: 0.0.40
codegen_flags: <defaults>
</compile_context>

<pallas_src>
from functools import partial

import numpy as np
import jax
import jax.numpy as jnp
from jax.experimental import pallas as pl
from jax.experimental.pallas import tpu as pltpu


# ------------------------------ fused kernel --------------------------------


def _lenet5_kernel(
    lhs1_ref,                    # [tb*r1p, 4*W*Cin]   conv1 banded-im2col LHS (host-built)
    w1_ref, b1_ref,              # [4*W*Cin, 4*q1], [1, 4*q1]
    w2_ref, b2_ref,              # [3*q1, 2*q2],    [1, 2*q2]
    wfc1_ref, bfc1_ref,          # [flat, 120],     [1, 120]
    wfc2_ref, bfc2_ref,          # [120, 84],       [1, 84]
    wfc3_ref, bfc3_ref,          # [84, classes],   [1, classes]
    out_ref,                     # [tb, classes]
    *, tb, r1p, q1, q2, ph2,
):
    f32 = jnp.float32
    R = tb * r1p

    # ---- conv1 + ReLU + full 2x2 max-pool: ONE matmul + 3 lane-block maxes -------
    c1 = jnp.dot(lhs1_ref[...], w1_ref[...], preferred_element_type=f32) + b1_ref[...]
    c1 = jnp.maximum(c1, 0.0)                                             # [R, 4*q1]
    p1 = jnp.maximum(jnp.maximum(c1[:, 0:q1], c1[:, q1:2 * q1]),
                     jnp.maximum(c1[:, 2 * q1:3 * q1], c1[:, 3 * q1:4 * q1]))  # [R, q1]

    # ---- conv2 + ReLU + horizontal pool: one lane concat + ONE matmul ------------
    lhs2 = jnp.concatenate([p1[0:R - 2, :], p1[1:R - 1, :], p1[2:R, :]], axis=1)  # [R-2, 3*q1]
    c2 = jnp.dot(lhs2, w2_ref[...], preferred_element_type=f32) + b2_ref[...]
    c2 = jnp.maximum(c2, 0.0)                                             # [R-2, 2*q2]
    hpool = jnp.maximum(c2[:, 0:q2], c2[:, q2:2 * q2])                    # [R-2, q2]

    # ---- vertical half of pool2 fused with the flatten ---------------------------
    # Each pooled row lands directly in its (h, w, c) lane slot of a dense feature
    # row, so fc1's LHS is a single [tb, flat] slab (no 25-way lane concat).
    rows = []
    for t in range(tb):                       # tb is small & static
        base = t * r1p
        pieces = [
            jnp.maximum(hpool[base + 2 * ph:base + 2 * ph + 1, :],
                        hpool[base + 2 * ph + 1:base + 2 * ph + 2, :])
            for ph in range(ph2)
        ]
        rows.append(jnp.concatenate(pieces, axis=1))                      # [1, ph2*q2]
    feats = rows[0] if tb == 1 else jnp.concatenate(rows, axis=0)         # [tb, flat]

    # ---- fc chain -----------------------------------------------------------------
    h1 = jnp.maximum(
        jnp.dot(feats, wfc1_ref[...], preferred_element_type=f32) + bfc1_ref[...], 0.0)
    h2 = jnp.maximum(
        jnp.dot(h1, wfc2_ref[...], preferred_element_type=f32) + bfc2_ref[...], 0.0)
    logits = jnp.dot(h2, wfc3_ref[...], preferred_element_type=f32) + bfc3_ref[...]
    out_ref[...] = logits.astype(out_ref.dtype)


# ------------------------------- host-side prep ------------------------------


def _spatial_dims(H, W, k=3):
    OH1, OW1 = H - k + 1, W - k + 1
    PH1, PW1 = OH1 // 2, OW1 // 2
    OH2, OW2 = PH1 - k + 1, PW1 - k + 1
    PH2, PW2 = OH2 // 2, OW2 // 2
    return OH1, OW1, PH1, PW1, OH2, OW2, PH2, PW2


def prepare_params(params, input_height=28, input_width=28):
    """One-time host-side re-layout of PyTorch-shaped params into kernel layouts."""
    H, W = input_height, input_width
    w1 = np.asarray(params["w_conv1"])          # [C1, Cin, 3, 3]
    b1 = np.asarray(params["b_conv1"])
    w2 = np.asarray(params["w_conv2"])          # [C2, C1, 3, 3]
    b2 = np.asarray(params["b_conv2"])
    C1, Cin, KH, KW = w1.shape
    C2 = w2.shape[0]
    _, _, PH1, PW1, _, _, PH2, PW2 = _spatial_dims(H, W, KH)

    # conv1 band matrix: rows index (input-row offset dr in the 4-row group, w, ci);
    # columns grouped [dh=0/ow-even | dh=0/ow-odd | dh=1/ow-even | dh=1/ow-odd],
    # each block laid out (pw, co) -> the 2x2 pool is 3 lane-block maxes in-kernel.
    L1, N1 = 4 * W * Cin, 4 * PW1 * C1
    w1_band = np.zeros((L1, N1), np.float32)
    for dh in range(2):
        for i in range(KH):
            dr = dh + i
            for j in range(KW):
                for ow in range(2 * PW1):
                    blk = dh * 2 + (ow % 2)
                    col0 = blk * PW1 * C1 + (ow // 2) * C1
                    row0 = dr * W * Cin + (ow + j) * Cin
                    w1_band[row0:row0 + Cin, col0:col0 + C1] = w1[:, :, i, j].T
    b1_row = np.tile(b1, 4 * PW1).reshape(1, N1).astype(np.float32)

    # conv2 band matrix: rows index (kernel row i, pw, ci) of the lane-concatenated
    # pooled slab; columns grouped [ow-even | ow-odd] so the horizontal pool is one
    # lane-block max; any odd leftover output column is simply dropped (pool floors).
    L2, N2 = 3 * PW1 * C1, 2 * PW2 * C2
    w2_band = np.zeros((L2, N2), np.float32)
    for i in range(KH):
        for j in range(KW):
            for ow in range(2 * PW2):
                blk = ow % 2
                col0 = blk * PW2 * C2 + (ow // 2) * C2
                row0 = i * PW1 * C1 + (ow + j) * C1
                w2_band[row0:row0 + C1, col0:col0 + C2] = w2[:, :, i, j].T
    b2_row = np.tile(b2, 2 * PW2).reshape(1, N2).astype(np.float32)

    # fc1: torch flatten order is (c, h, w); kernel feature order is (h, w, c).
    wfc1 = np.asarray(params["w_fc1"])          # [120, flat]
    nf1 = wfc1.shape[0]
    wfc1_perm = wfc1.reshape(nf1, C2, PH2, PW2).transpose(2, 3, 1, 0).reshape(
        PH2 * PW2 * C2, nf1)

    return dict(
        w1_band=jnp.asarray(w1_band), b1_row=jnp.asarray(b1_row),
        w2_band=jnp.asarray(w2_band), b2_row=jnp.asarray(b2_row),
        wfc1=jnp.asarray(wfc1_perm),
        bfc1=jnp.asarray(params["b_fc1"]).reshape(1, -1),
        wfc2=jnp.asarray(params["w_fc2"]).T,
        bfc2=jnp.asarray(params["b_fc2"]).reshape(1, -1),
        wfc3=jnp.asarray(params["w_fc3"]).T,
        bfc3=jnp.asarray(params["b_fc3"]).reshape(1, -1),
    )


def lenet5_forward(x, prep, num_samples=1, batch_tile=None):
    """Fused Pallas LeNet5 forward. x: NCHW [B, C, H, W] float32."""
    B, Cin, H, W = x.shape
    _, _, PH1, PW1, _, _, PH2, PW2 = _spatial_dims(H, W, 3)
    C1 = prep["b1_row"].shape[1] // (4 * PW1)
    C2 = prep["b2_row"].shape[1] // (2 * PW2)
    NC = prep["wfc3"].shape[1]
    q1, q2 = PW1 * C1, PW2 * C2

    if batch_tile is None:
        batch_tile = next(t for t in (8, 4, 2, 1) if B % t == 0)
    assert B % batch_tile == 0, (B, batch_tile)
    G = B // batch_tile
    R1P = ((PH1 + 7) // 8) * 8          # rows per sample, padded to a sublane multiple
    L1 = 4 * W * Cin

    # Host-side layout plumbing: pack the 4 consecutive input rows feeding each pooled
    # output row into one dense lane slab (w-major, ci-minor), pad rows per sample.
    x_rows = jnp.transpose(x.astype(jnp.float32), (0, 2, 3, 1)).reshape(B, H, W * Cin)
    lhs1 = jnp.concatenate(
        [x_rows[:, dr:dr + 2 * PH1:2, :] for dr in range(4)], axis=-1)   # [B, PH1, L1]
    lhs1 = jnp.pad(lhs1, ((0, 0), (0, R1P - PH1), (0, 0)))
    lhs1 = lhs1.reshape(G, batch_tile * R1P, L1)

    operands = (lhs1,
                prep["w1_band"], prep["b1_row"],
                prep["w2_band"], prep["b2_row"],
                prep["wfc1"], prep["bfc1"],
                prep["wfc2"], prep["bfc2"],
                prep["wfc3"], prep["bfc3"])

    def resident(a):                    # weights: constant index_map -> VMEM resident
        nd = a.ndim
        return pl.BlockSpec(a.shape, lambda g, _nd=nd: (0,) * _nd)

    in_specs = [pl.BlockSpec((None, batch_tile * R1P, L1), lambda g: (g, 0, 0))]
    in_specs += [resident(a) for a in operands[1:]]

    out = pl.pallas_call(
        partial(_lenet5_kernel, tb=batch_tile, r1p=R1P, q1=q1, q2=q2, ph2=PH2),
        out_shape=jax.ShapeDtypeStruct((G, batch_tile, NC), jnp.float32),
        grid=(G,),
        in_specs=in_specs,
        out_specs=pl.BlockSpec((None, batch_tile, NC), lambda g: (g, 0, 0)),
        compiler_params=pltpu.CompilerParams(
            dimension_semantics=("parallel",)),
    )(*operands)

    out = out.reshape(B, NC)
    if num_samples > 1:
        # TODO(synk): ELRG posterior sampling (initial variance 1e-12) is omitted, so all
        # samples are identical on the deterministic mean-weight path; replicate along
        # dim 0 to match torch.cat(y) semantics.
        out = jnp.tile(out, (num_samples, 1))
    return out


# ------------------------- params / reference / demo -------------------------


def init_params(key, num_classes=10, input_width=28, input_height=28, input_channels=1):
    """Deterministic synthetic parameters with the same shapes as the module."""
    cw1 = input_width - 3 + 1
    ch1 = input_height - 3 + 1
    cw = cw1 // 2 - 3 + 1
    ch = ch1 // 2 - 3 + 1
    flat = (ch // 2) * (cw // 2) * 16

    keys = jax.random.split(key, 10)
    s = 0.1
    return dict(
        w_conv1=jax.random.normal(keys[0], (6, input_channels, 3, 3), jnp.float32) * s,
        b_conv1=jax.random.normal(keys[1], (6,), jnp.float32) * s,
        w_conv2=jax.random.normal(keys[2], (16, 6, 3, 3), jnp.float32) * s,
        b_conv2=jax.random.normal(keys[3], (16,), jnp.float32) * s,
        w_fc1=jax.random.normal(keys[4], (120, flat), jnp.float32) * s,
        b_fc1=jax.random.normal(keys[5], (120,), jnp.float32) * s,
        w_fc2=jax.random.normal(keys[6], (84, 120), jnp.float32) * s,
        b_fc2=jax.random.normal(keys[7], (84,), jnp.float32) * s,
        w_fc3=jax.random.normal(keys[8], (num_classes, 84), jnp.float32) * s,
        b_fc3=jax.random.normal(keys[9], (num_classes,), jnp.float32) * s,
    )


def lenet5_reference(x, params):
    """Pure-JAX reference (lax.conv / reduce_window) for a correctness check."""
    def conv(inp, w, b):
        y = jax.lax.conv_general_dilated(
            inp, w, (1, 1), "VALID", dimension_numbers=("NCHW", "OIHW", "NCHW"))
        return y + b[None, :, None, None]

    def pool(inp):
        return jax.lax.reduce_window(
            inp, -jnp.inf, jax.lax.max, (1, 1, 2, 2), (1, 1, 2, 2), "VALID")

    z = jax.nn.relu(conv(x, params["w_conv1"], params["b_conv1"]))
    z = pool(z)
    z = jax.nn.relu(conv(z, params["w_conv2"], params["b_conv2"]))
    z = pool(z)
    z = z.reshape(x.shape[0], -1)
    z = jax.nn.relu(z @ params["w_fc1"].T + params["b_fc1"])
    z = jax.nn.relu(z @ params["w_fc2"].T + params["b_fc2"])
    return z @ params["w_fc3"].T + params["b_fc3"]


if __name__ == "__main__":
    key = jax.random.PRNGKey(0)
    k_x, k_p = jax.random.split(key)

    B, C, H, W = 4, 1, 28, 28  # default LeNet5 input size, small batch
    x = jax.random.normal(k_x, (B, C, H, W), jnp.float32)
    params = init_params(k_p, num_classes=10, input_width=W, input_height=H,
                         input_channels=C)
    prep = prepare_params(params, input_height=H, input_width=W)

    # batch_tile=2 -> grid=(2,) so the batch grid / index maps actually get exercised.
    fwd = jax.jit(lambda xx: lenet5_forward(xx, prep, num_samples=1, batch_tile=2))
    out = jax.block_until_ready(fwd(x))
    assert out.shape == (B, 10), out.shape

    ref = jax.block_until_ready(lenet5_reference(x, params))
    err = float(jnp.max(jnp.abs(out - ref)))
    assert jnp.allclose(out, ref, rtol=1e-3, atol=1e-3), err

    print("KERNEL_OK")
</pallas_src>

<mosaic_0001>
module attributes {stable_mosaic.version = 11 : i64} {
  func.func @_lenet5_kernel(%arg0: i32, %arg1: memref<1x32x112xf32, #tpu.memory_space<vmem>>, %arg2: memref<112x312xf32, #tpu.memory_space<vmem>>, %arg3: memref<1x312xf32, #tpu.memory_space<vmem>>, %arg4: memref<234x160xf32, #tpu.memory_space<vmem>>, %arg5: memref<1x160xf32, #tpu.memory_space<vmem>>, %arg6: memref<400x120xf32, #tpu.memory_space<vmem>>, %arg7: memref<1x120xf32, #tpu.memory_space<vmem>>, %arg8: memref<120x84xf32, #tpu.memory_space<vmem>>, %arg9: memref<1x84xf32, #tpu.memory_space<vmem>>, %arg10: memref<84x10xf32, #tpu.memory_space<vmem>>, %arg11: memref<1x10xf32, #tpu.memory_space<vmem>>, %arg12: memref<1x2x10xf32, #tpu.memory_space<vmem>>) attributes {dimension_semantics = [#tpu.dimension_semantics<parallel>], iteration_bounds = array<i64: 2>, scalar_prefetch = 0 : i64, scratch_operands = 0 : i64, tpu.core_type = #tpu.core_type<tc>, window_params = [{transform_indices = @transform_0, window_bounds = array<i64: 1, 32, 112>}, {pipeline_mode = #tpu.pipeline_mode<synchronous>, transform_indices = @transform_1, window_bounds = array<i64: 112, 312>}, {pipeline_mode = #tpu.pipeline_mode<synchronous>, transform_indices = @transform_2, window_bounds = array<i64: 1, 312>}, {pipeline_mode = #tpu.pipeline_mode<synchronous>, transform_indices = @transform_3, window_bounds = array<i64: 234, 160>}, {pipeline_mode = #tpu.pipeline_mode<synchronous>, transform_indices = @transform_4, window_bounds = array<i64: 1, 160>}, {pipeline_mode = #tpu.pipeline_mode<synchronous>, transform_indices = @transform_5, window_bounds = array<i64: 400, 120>}, {pipeline_mode = #tpu.pipeline_mode<synchronous>, transform_indices = @transform_6, window_bounds = array<i64: 1, 120>}, {pipeline_mode = #tpu.pipeline_mode<synchronous>, transform_indices = @transform_7, window_bounds = array<i64: 120, 84>}, {pipeline_mode = #tpu.pipeline_mode<synchronous>, transform_indices = @transform_8, window_bounds = array<i64: 1, 84>}, {pipeline_mode = #tpu.pipeline_mode<synchronous>, transform_indices = @transform_9, window_bounds = array<i64: 84, 10>}, {pipeline_mode = #tpu.pipeline_mode<synchronous>, transform_indices = @transform_10, window_bounds = array<i64: 1, 10>}, {transform_indices = @transform_11, window_bounds = array<i64: 1, 2, 10>}]} {
    %c0 = arith.constant 0 : index
    %c0_0 = arith.constant 0 : index
    %c0_1 = arith.constant 0 : index
    %0 = vector.load %arg1[%c0, %c0_0, %c0_1] : memref<1x32x112xf32, #tpu.memory_space<vmem>>, vector<1x32x112xf32>
    %1 = vector.shape_cast %0 : vector<1x32x112xf32> to vector<32x112xf32>
    %c0_2 = arith.constant 0 : index
    %c0_3 = arith.constant 0 : index
    %2 = vector.load %arg2[%c0_2, %c0_3] : memref<112x312xf32, #tpu.memory_space<vmem>>, vector<112x312xf32>
    %cst = arith.constant dense<0.000000e+00> : vector<32x312xf32>
    %3 = tpu.matmul %1, %2, %cst {dimension_numbers = #tpu.dot_dimension_numbers<[1], [0], [0], [1], [0, 0, 1, 1], [], []>} : vector<32x112xf32>, vector<112x312xf32>, vector<32x312xf32> -> vector<32x312xf32>
    %c0_4 = arith.constant 0 : index
    %c0_5 = arith.constant 0 : index
    %4 = vector.load %arg3[%c0_4, %c0_5] : memref<1x312xf32, #tpu.memory_space<vmem>>, vector<1x312xf32>
    %5 = vector.broadcast %4 : vector<1x312xf32> to vector<32x312xf32>
    %6 = arith.addf %3, %5 : vector<32x312xf32>
    %cst_6 = arith.constant 0.000000e+00 : f32
    %7 = vector.broadcast %cst_6 : f32 to vector<32x312xf32>
    %8 = arith.maximumf %6, %7 : vector<32x312xf32>
    %9 = vector.extract_strided_slice %8 {offsets = [0, 0], sizes = [32, 78], strides = [1, 1]} : vector<32x312xf32> to vector<32x78xf32>
    %10 = vector.extract_strided_slice %8 {offsets = [0, 78], sizes = [32, 78], strides = [1, 1]} : vector<32x312xf32> to vector<32x78xf32>
    %11 = arith.maximumf %9, %10 : vector<32x78xf32>
    %12 = vector.extract_strided_slice %8 {offsets = [0, 156], sizes = [32, 78], strides = [1, 1]} : vector<32x312xf32> to vector<32x78xf32>
    %13 = vector.extract_strided_slice %8 {offsets = [0, 234], sizes = [32, 78], strides = [1, 1]} : vector<32x312xf32> to vector<32x78xf32>
    %14 = arith.maximumf %12, %13 : vector<32x78xf32>
    %15 = arith.maximumf %11, %14 : vector<32x78xf32>
    %16 = vector.extract_strided_slice %15 {offsets = [0, 0], sizes = [30, 78], strides = [1, 1]} : vector<32x78xf32> to vector<30x78xf32>
    %17 = vector.extract_strided_slice %15 {offsets = [1, 0], sizes = [30, 78], strides = [1, 1]} : vector<32x78xf32> to vector<30x78xf32>
    %18 = vector.extract_strided_slice %15 {offsets = [2, 0], sizes = [30, 78], strides = [1, 1]} : vector<32x78xf32> to vector<30x78xf32>
    %19 = tpu.concatenate %16, %17, %18 in 1 : vector<30x78xf32>, vector<30x78xf32>, vector<30x78xf32> -> vector<30x234xf32>
    %c0_7 = arith.constant 0 : index
    %c0_8 = arith.constant 0 : index
    %20 = vector.load %arg4[%c0_7, %c0_8] : memref<234x160xf32, #tpu.memory_space<vmem>>, vector<234x160xf32>
    %cst_9 = arith.constant dense<0.000000e+00> : vector<30x160xf32>
    %21 = tpu.matmul %19, %20, %cst_9 {dimension_numbers = #tpu.dot_dimension_numbers<[1], [0], [0], [1], [0, 0, 1, 1], [], []>} : vector<30x234xf32>, vector<234x160xf32>, vector<30x160xf32> -> vector<30x160xf32>
    %c0_10 = arith.constant 0 : index
    %c0_11 = arith.constant 0 : index
    %22 = vector.load %arg5[%c0_10, %c0_11] : memref<1x160xf32, #tpu.memory_space<vmem>>, vector<1x160xf32>
    %23 = vector.broadcast %22 : vector<1x160xf32> to vector<30x160xf32>
    %24 = arith.addf %21, %23 : vector<30x160xf32>
    %cst_12 = arith.constant 0.000000e+00 : f32
    %25 = vector.broadcast %cst_12 : f32 to vector<30x160xf32>
    %26 = arith.maximumf %24, %25 : vector<30x160xf32>
    %27 = vector.extract_strided_slice %26 {offsets = [0, 0], sizes = [30, 80], strides = [1, 1]} : vector<30x160xf32> to vector<30x80xf32>
    %28 = vector.extract_strided_slice %26 {offsets = [0, 80], sizes = [30, 80], strides = [1, 1]} : vector<30x160xf32> to vector<30x80xf32>
    %29 = arith.maximumf %27, %28 : vector<30x80xf32>
    %30 = vector.extract_strided_slice %29 {offsets = [0, 0], sizes = [1, 80], strides = [1, 1]} : vector<30x80xf32> to vector<1x80xf32>
    %31 = vector.extract_strided_slice %29 {offsets = [1, 0], sizes = [1, 80], strides = [1, 1]} : vector<30x80xf32> to vector<1x80xf32>
    %32 = arith.maximumf %30, %31 : vector<1x80xf32>
    %33 = vector.extract_strided_slice %29 {offsets = [2, 0], sizes = [1, 80], strides = [1, 1]} : vector<30x80xf32> to vector<1x80xf32>
    %34 = vector.extract_strided_slice %29 {offsets = [3, 0], sizes = [1, 80], strides = [1, 1]} : vector<30x80xf32> to vector<1x80xf32>
    %35 = arith.maximumf %33, %34 : vector<1x80xf32>
    %36 = vector.extract_strided_slice %29 {offsets = [4, 0], sizes = [1, 80], strides = [1, 1]} : vector<30x80xf32> to vector<1x80xf32>
    %37 = vector.extract_strided_slice %29 {offsets = [5, 0], sizes = [1, 80], strides = [1, 1]} : vector<30x80xf32> to vector<1x80xf32>
    %38 = arith.maximumf %36, %37 : vector<1x80xf32>
    %39 = vector.extract_strided_slice %29 {offsets = [6, 0], sizes = [1, 80], strides = [1, 1]} : vector<30x80xf32> to vector<1x80xf32>
    %40 = vector.extract_strided_slice %29 {offsets = [7, 0], sizes = [1, 80], strides = [1, 1]} : vector<30x80xf32> to vector<1x80xf32>
    %41 = arith.maximumf %39, %40 : vector<1x80xf32>
    %42 = vector.extract_strided_slice %29 {offsets = [8, 0], sizes = [1, 80], strides = [1, 1]} : vector<30x80xf32> to vector<1x80xf32>
    %43 = vector.extract_strided_slice %29 {offsets = [9, 0], sizes = [1, 80], strides = [1, 1]} : vector<30x80xf32> to vector<1x80xf32>
    %44 = arith.maximumf %42, %43 : vector<1x80xf32>
    %45 = tpu.concatenate %32, %35, %38, %41, %44 in 1 : vector<1x80xf32>, vector<1x80xf32>, vector<1x80xf32>, vector<1x80xf32>, vector<1x80xf32> -> vector<1x400xf32>
    %46 = vector.extract_strided_slice %29 {offsets = [16, 0], sizes = [1, 80], strides = [1, 1]} : vector<30x80xf32> to vector<1x80xf32>
    %47 = vector.extract_strided_slice %29 {offsets = [17, 0], sizes = [1, 80], strides = [1, 1]} : vector<30x80xf32> to vector<1x80xf32>
    %48 = arith.maximumf %46, %47 : vector<1x80xf32>
    %49 = vector.extract_strided_slice %29 {offsets = [18, 0], sizes = [1, 80], strides = [1, 1]} : vector<30x80xf32> to vector<1x80xf32>
    %50 = vector.extract_strided_slice %29 {offsets = [19, 0], sizes = [1, 80], strides = [1, 1]} : vector<30x80xf32> to vector<1x80xf32>
    %51 = arith.maximumf %49, %50 : vector<1x80xf32>
    %52 = vector.extract_strided_slice %29 {offsets = [20, 0], sizes = [1, 80], strides = [1, 1]} : vector<30x80xf32> to vector<1x80xf32>
    %53 = vector.extract_strided_slice %29 {offsets = [21, 0], sizes = [1, 80], strides = [1, 1]} : vector<30x80xf32> to vector<1x80xf32>
    %54 = arith.maximumf %52, %53 : vector<1x80xf32>
    %55 = vector.extract_strided_slice %29 {offsets = [22, 0], sizes = [1, 80], strides = [1, 1]} : vector<30x80xf32> to vector<1x80xf32>
    %56 = vector.extract_strided_slice %29 {offsets = [23, 0], sizes = [1, 80], strides = [1, 1]} : vector<30x80xf32> to vector<1x80xf32>
    %57 = arith.maximumf %55, %56 : vector<1x80xf32>
    %58 = vector.extract_strided_slice %29 {offsets = [24, 0], sizes = [1, 80], strides = [1, 1]} : vector<30x80xf32> to vector<1x80xf32>
    %59 = vector.extract_strided_slice %29 {offsets = [25, 0], sizes = [1, 80], strides = [1, 1]} : vector<30x80xf32> to vector<1x80xf32>
    %60 = arith.maximumf %58, %59 : vector<1x80xf32>
    %61 = tpu.concatenate %48, %51, %54, %57, %60 in 1 : vector<1x80xf32>, vector<1x80xf32>, vector<1x80xf32>, vector<1x80xf32>, vector<1x80xf32> -> vector<1x400xf32>
    %62 = tpu.concatenate %45, %61 in 0 : vector<1x400xf32>, vector<1x400xf32> -> vector<2x400xf32>
    %c0_13 = arith.constant 0 : index
    %c0_14 = arith.constant 0 : index
    %63 = vector.load %arg6[%c0_13, %c0_14] : memref<400x120xf32, #tpu.memory_space<vmem>>, vector<400x120xf32>
    %cst_15 = arith.constant dense<0.000000e+00> : vector<2x120xf32>
    %64 = tpu.matmul %62, %63, %cst_15 {dimension_numbers = #tpu.dot_dimension_numbers<[1], [0], [0], [1], [0, 0, 1, 1], [], []>} : vector<2x400xf32>, vector<400x120xf32>, vector<2x120xf32> -> vector<2x120xf32>
    %c0_16 = arith.constant 0 : index
    %c0_17 = arith.constant 0 : index
    %65 = vector.load %arg7[%c0_16, %c0_17] : memref<1x120xf32, #tpu.memory_space<vmem>>, vector<1x120xf32>
    %66 = vector.broadcast %65 : vector<1x120xf32> to vector<2x120xf32>
    %67 = arith.addf %64, %66 : vector<2x120xf32>
    %cst_18 = arith.constant 0.000000e+00 : f32
    %68 = vector.broadcast %cst_18 : f32 to vector<2x120xf32>
    %69 = arith.maximumf %67, %68 : vector<2x120xf32>
    %c0_19 = arith.constant 0 : index
    %c0_20 = arith.constant 0 : index
    %70 = vector.load %arg8[%c0_19, %c0_20] : memref<120x84xf32, #tpu.memory_space<vmem>>, vector<120x84xf32>
    %cst_21 = arith.constant dense<0.000000e+00> : vector<2x84xf32>
    %71 = tpu.matmul %69, %70, %cst_21 {dimension_numbers = #tpu.dot_dimension_numbers<[1], [0], [0], [1], [0, 0, 1, 1], [], []>} : vector<2x120xf32>, vector<120x84xf32>, vector<2x84xf32> -> vector<2x84xf32>
    %c0_22 = arith.constant 0 : index
    %c0_23 = arith.constant 0 : index
    %72 = vector.load %arg9[%c0_22, %c0_23] : memref<1x84xf32, #tpu.memory_space<vmem>>, vector<1x84xf32>
    %73 = vector.broadcast %72 : vector<1x84xf32> to vector<2x84xf32>
    %74 = arith.addf %71, %73 : vector<2x84xf32>
    %cst_24 = arith.constant 0.000000e+00 : f32
    %75 = vector.broadcast %cst_24 : f32 to vector<2x84xf32>
    %76 = arith.maximumf %74, %75 : vector<2x84xf32>
    %c0_25 = arith.constant 0 : index
    %c0_26 = arith.constant 0 : index
    %77 = vector.load %arg10[%c0_25, %c0_26] : memref<84x10xf32, #tpu.memory_space<vmem>>, vector<84x10xf32>
    %cst_27 = arith.constant dense<0.000000e+00> : vector<2x10xf32>
    %78 = tpu.matmul %76, %77, %cst_27 {dimension_numbers = #tpu.dot_dimension_numbers<[1], [0], [0], [1], [0, 0, 1, 1], [], []>} : vector<2x84xf32>, vector<84x10xf32>, vector<2x10xf32> -> vector<2x10xf32>
    %c0_28 = arith.constant 0 : index
    %c0_29 = arith.constant 0 : index
    %79 = vector.load %arg11[%c0_28, %c0_29] : memref<1x10xf32, #tpu.memory_space<vmem>>, vector<1x10xf32>
    %80 = vector.broadcast %79 : vector<1x10xf32> to vector<2x10xf32>
    %81 = arith.addf %78, %80 : vector<2x10xf32>
    %c0_30 = arith.constant 0 : index
    %c0_31 = arith.constant 0 : index
    %c0_32 = arith.constant 0 : index
    %82 = vector.load %arg12[%c0_30, %c0_31, %c0_32] : memref<1x2x10xf32, #tpu.memory_space<vmem>>, vector<1x2x10xf32>
    %83 = vector.shape_cast %82 : vector<1x2x10xf32> to vector<2x10xf32>
    %84 = vector.shape_cast %81 : vector<2x10xf32> to vector<1x2x10xf32>
    tpu.vector_store %arg12[%c0_30, %c0_31, %c0_32], %84 {strides = array<i32>} : memref<1x2x10xf32, #tpu.memory_space<vmem>>, vector<1x2x10xf32>,
    return
  }
  func.func @transform_0(%arg0: i32) -> (i32, i32, i32) {
    %c0_i32 = arith.constant 0 : i32
    %c0_i32_0 = arith.constant 0 : i32
    %c0_i32_1 = arith.constant 0 : i32
    return %arg0, %c0_i32, %c0_i32_0 : i32, i32, i32
  }
  func.func @transform_1(%arg0: i32) -> (i32, i32) {
    %c0_i32 = arith.constant 0 : i32
    %c0_i32_0 = arith.constant 0 : i32
    %c0_i32_1 = arith.constant 0 : i32
    return %c0_i32, %c0_i32_0 : i32, i32
  }
  func.func @transform_2(%arg0: i32) -> (i32, i32) {
    %c0_i32 = arith.constant 0 : i32
    %c0_i32_0 = arith.constant 0 : i32
    %c0_i32_1 = arith.constant 0 : i32
    return %c0_i32, %c0_i32_0 : i32, i32
  }
  func.func @transform_3(%arg0: i32) -> (i32, i32) {
    %c0_i32 = arith.constant 0 : i32
    %c0_i32_0 = arith.constant 0 : i32
    %c0_i32_1 = arith.constant 0 : i32
    return %c0_i32, %c0_i32_0 : i32, i32
  }
  func.func @transform_4(%arg0: i32) -> (i32, i32) {
    %c0_i32 = arith.constant 0 : i32
    %c0_i32_0 = arith.constant 0 : i32
    %c0_i32_1 = arith.constant 0 : i32
    return %c0_i32, %c0_i32_0 : i32, i32
  }
  func.func @transform_5(%arg0: i32) -> (i32, i32) {
    %c0_i32 = arith.constant 0 : i32
    %c0_i32_0 = arith.constant 0 : i32
    %c0_i32_1 = arith.constant 0 : i32
    return %c0_i32, %c0_i32_0 : i32, i32
  }
  func.func @transform_6(%arg0: i32) -> (i32, i32) {
    %c0_i32 = arith.constant 0 : i32
    %c0_i32_0 = arith.constant 0 : i32
    %c0_i32_1 = arith.constant 0 : i32
    return %c0_i32, %c0_i32_0 : i32, i32
  }
  func.func @transform_7(%arg0: i32) -> (i32, i32) {
    %c0_i32 = arith.constant 0 : i32
    %c0_i32_0 = arith.constant 0 : i32
    %c0_i32_1 = arith.constant 0 : i32
    return %c0_i32, %c0_i32_0 : i32, i32
  }
  func.func @transform_8(%arg0: i32) -> (i32, i32) {
    %c0_i32 = arith.constant 0 : i32
    %c0_i32_0 = arith.constant 0 : i32
    %c0_i32_1 = arith.constant 0 : i32
    return %c0_i32, %c0_i32_0 : i32, i32
  }
  func.func @transform_9(%arg0: i32) -> (i32, i32) {
    %c0_i32 = arith.constant 0 : i32
    %c0_i32_0 = arith.constant 0 : i32
    %c0_i32_1 = arith.constant 0 : i32
    return %c0_i32, %c0_i32_0 : i32, i32
  }
  func.func @transform_10(%arg0: i32) -> (i32, i32) {
    %c0_i32 = arith.constant 0 : i32
    %c0_i32_0 = arith.constant 0 : i32
    %c0_i32_1 = arith.constant 0 : i32
    return %c0_i32, %c0_i32_0 : i32, i32
  }
  func.func @transform_11(%arg0: i32) -> (i32, i32, i32) {
    %c0_i32 = arith.constant 0 : i32
    %c0_i32_0 = arith.constant 0 : i32
    %c0_i32_1 = arith.constant 0 : i32
    return %arg0, %c0_i32, %c0_i32_0 : i32, i32, i32
  }
}

</mosaic_0001>

<llo_original>
// kernel: _lambda_.1
$region0: #{_lambda_.1}
  #allocation0 [shape = 'u32[]', space=smem, size = 0x4, offset = 0x4, fixed_abs, tag = 'smem constant byte address 0x4 - core index']
  #allocation1 [shape = 'u32[144,128]{1,0:T(1,128)}', space=vmem, size = 0x12000, scoped, tag = 'internal scratch']
  %s0 = inlined_call_operand.vmem [shape: f32[2,32,112], index: 0, kind: input, shape index: {}]
  %s1 = inlined_call_operand.hbm [shape: f32[112,312], index: 1, kind: input, shape index: {}]
  %s2 = inlined_call_operand.vmem [shape: f32[1,312], index: 2, kind: input, shape index: {}]
  %s3 = inlined_call_operand.vmem [shape: f32[234,160], index: 3, kind: input, shape index: {}]
  %s4 = inlined_call_operand.vmem [shape: f32[1,160], index: 4, kind: input, shape index: {}]
  %s5 = inlined_call_operand.vmem [shape: f32[400,120], index: 5, kind: input, shape index: {}]
  %s6 = inlined_call_operand.vmem [shape: f32[1,120], index: 6, kind: input, shape index: {}]
  %s7 = inlined_call_operand.vmem [shape: f32[120,84], index: 7, kind: input, shape index: {}]
  %s8 = inlined_call_operand.vmem [shape: f32[1,84], index: 8, kind: input, shape index: {}]
  %s9 = inlined_call_operand.vmem [shape: f32[84,10], index: 9, kind: input, shape index: {}]
  %s10 = inlined_call_operand.vmem [shape: f32[1,10], index: 10, kind: input, shape index: {}]
  %s11 = inlined_call_operand.hbm [shape: f32[2,2,10], index: 11, kind: output, shape index: {}]
  %s12 = sld [smem:[#allocation0]]
  $region81: #{_lambda_.1} parent=0
    _
  %s14 = ssub.s32 1, %s12
  %s15 = scalar_select 0, %s14, %s12
  $region1: #{_lambda_.1} parent=0
    #allocation2 [shape = 'u8[172032]{0}', space=vmem, size = 0x2a000, scoped, tag = 'input window, operand 1, single buffered']
    #allocation3 [shape = 's32[2]{0}', space=sflag, size = 0x8, scoped, tag = 'scoped memory for _lambda_.1']
    #allocation4 [shape = 's32[2]{0}', space=sflag, size = 0x8, scoped, tag = 'scoped memory for _lambda_.1']
    #allocation5 [shape = 'u8[2048]{0}', space=vmem, size = 0x800, scoped, tag = 'output window, operand 0']
    %16 = vsyncpa [#allocation3], 0
    %17 = vsyncpa [#allocation4], 0
    %s18 = scalar_lea.sflag [#allocation4], 1
    %19 = vsyncpa %s18, 0
    loop: start=0, step=1, limit=4
    $region2: #{_lambda_.1} parent=1 // loop_pre_header
      _
    $region3: #{_lambda_.1} parent=1 // loop_header
      %s21 = sphi 0, %s25
      %p22 = scmp.ge.s32.totalorder %s21, 4
      %s31 = sphi 0, %s33
      %s34 = sphi 0, %s31
      %s35 = sphi 0, %s34
      %s51 = sphi 0, %s35
      %s55 = sphi 0, %s55
      %s57 = sphi 0, %s55
      %s58 = sphi 0, %s57
      %s72 = sphi 0, %s58
      %s76 = sphi 0, %s76
      %s78 = sphi 0, %s76
      %s79 = sphi 0, %s78
      %s93 = sphi 0, %s79
      %s97 = sphi 0, %s97
      %s99 = sphi 0, %s97
      %s100 = sphi 0, %s99
      %s114 = sphi 0, %s100
      %s118 = sphi 0, %s118
      %s120 = sphi 0, %s118
      %s121 = sphi 0, %s120
      %s135 = sphi 0, %s121
      %s139 = sphi 0, %s139
      %s141 = sphi 0, %s139
      %s142 = sphi 0, %s141
      %s156 = sphi 0, %s142
      %s160 = sphi 0, %s160
      %s162 = sphi 0, %s160
      %s163 = sphi 0, %s162
      %s177 = sphi 0, %s163
      %s181 = sphi 0, %s181
      %s183 = sphi 0, %s181
      %s184 = sphi 0, %s183
      %s198 = sphi 0, %s184
      %s202 = sphi 0, %s202
      %s204 = sphi 0, %s202
      %s205 = sphi 0, %s204
      %s219 = sphi 0, %s205
      %s223 = sphi 0, %s223
      %s225 = sphi 0, %s223
      %s226 = sphi 0, %s225
      %s240 = sphi 0, %s226
      %s244 = sphi 0, %s244
      %s246 = sphi 0, %s244
      %s247 = sphi 0, %s246
      %s261 = sphi 0, %s247
      %s267 = sphi 0, %s269
      %s270 = sphi 0, %s267
      %s271 = sphi 0, %s270
      %s287 = sphi 0, %s271
    $region4: #{_lambda_.1} parent=1 // loop_header_branch
      %24 = sbr.rel (%p22) target = $region8
    $region5: #{_lambda_.1} parent=1 // loop_body
      %s26 = ssub.s32 %s21, 1
      %s27 = ssub.s32 %s21, 2
      %s28 = sadd.s32 %s21, 1
      %s29 = ssub.s32 %s21, %s28
      %p30 = scmp.eq.s32.totalorder %s29, 0
      %s32 = sadd.s32 %s31, 1
      %s33 = scalar_select %p30, %s31, %s32
      %p36 = pneg %p30
      %p37 = scmp.eq.s32.totalorder %s21, 1
      %p38 = por %p36, %p37
      %p39 = scmp.ne.s32.totalorder %s31, %s34
      %p40 = scmp.eq.s32.totalorder %s21, 0
      %p41 = por %p39, %p40
      %p42 = scmp.ne.s32.totalorder %s31, %s34
      %p43 = scmp.eq.s32.totalorder %s26, 1
      %p44 = por %p42, %p43
      %p45 = scmp.ne.s32.totalorder %s34, %s35
      %p46 = scmp.eq.s32.totalorder %s26, 0
      %p47 = por %p45, %p46
      %p48 = scmp.ne.s32.totalorder %s34, %s35
      %p49 = scmp.eq.s32.totalorder %s27, 1
      %p50 = por %p48, %p49
      %p52 = scmp.ne.s32.totalorder %s35, %s51
      %p53 = scmp.eq.s32.totalorder %s27, 0
      %p54 = por %p52, %p53
      %s56 = sadd.s32 %s55, 1
      %p59 = scmp.eq.s32.totalorder %s21, 1
      %p60 = scmp.ne.s32.totalorder %s55, %s57
      %p61 = scmp.eq.s32.totalorder %s21, 0
      %p62 = por %p60, %p61
      %p63 = scmp.ne.s32.totalorder %s55, %s57
      %p64 = scmp.eq.s32.totalorder %s26, 1
      %p65 = por %p63, %p64
      %p66 = scmp.ne.s32.totalorder %s57, %s58
      %p67 = scmp.eq.s32.totalorder %s26, 0
      %p68 = por %p66, %p67
      %p69 = scmp.ne.s32.totalorder %s57, %s58
      %p70 = scmp.eq.s32.totalorder %s27, 1
      %p71 = por %p69, %p70
      %p73 = scmp.ne.s32.totalorder %s58, %s72
      %p74 = scmp.eq.s32.totalorder %s27, 0
      %p75 = por %p73, %p74
      %s77 = sadd.s32 %s76, 1
      %p80 = scmp.eq.s32.totalorder %s21, 1
      %p81 = scmp.ne.s32.totalorder %s76, %s78
      %p82 = scmp.eq.s32.totalorder %s21, 0
      %p83 = por %p81, %p82
      %p84 = scmp.ne.s32.totalorder %s76, %s78
      %p85 = scmp.eq.s32.totalorder %s26, 1
      %p86 = por %p84, %p85
      %p87 = scmp.ne.s32.totalorder %s78, %s79
      %p88 = scmp.eq.s32.totalorder %s26, 0
      %p89 = por %p87, %p88
      %p90 = scmp.ne.s32.totalorder %s78, %s79
      %p91 = scmp.eq.s32.totalorder %s27, 1
      %p92 = por %p90, %p91
      %p94 = scmp.ne.s32.totalorder %s79, %s93
      %p95 = scmp.eq.s32.totalorder %s27, 0
      %p96 = por %p94, %p95
      %s98 = sadd.s32 %s97, 1
      %p101 = scmp.eq.s32.totalorder %s21, 1
      %p102 = scmp.ne.s32.totalorder %s97, %s99
      %p103 = scmp.eq.s32.totalorder %s21, 0
      %p104 = por %p102, %p103
      %p105 = scmp.ne.s32.totalorder %s97, %s99
      %p106 = scmp.eq.s32.totalorder %s26, 1
      %p107 = por %p105, %p106
      %p108 = scmp.ne.s32.totalorder %s99, %s100
      %p109 = scmp.eq.s32.totalorder %s26, 0
      %p110 = por %p108, %p109
      %p111 = scmp.ne.s32.totalorder %s99, %s100
      %p112 = scmp.eq.s32.totalorder %s27, 1
      %p113 = por %p111, %p112
      %p115 = scmp.ne.s32.totalorder %s100, %s114
      %p116 = scmp.eq.s32.totalorder %s27, 0
      %p117 = por %p115, %p116
      %s119 = sadd.s32 %s118, 1
      %p122 = scmp.eq.s32.totalorder %s21, 1
      %p123 = scmp.ne.s32.totalorder %s118, %s120
      %p124 = scmp.eq.s32.totalorder %s21, 0
      %p125 = por %p123, %p124
      %p126 = scmp.ne.s32.totalorder %s118, %s120
      %p127 = scmp.eq.s32.totalorder %s26, 1
      %p128 = por %p126, %p127
      %p129 = scmp.ne.s32.totalorder %s120, %s121
      %p130 = scmp.eq.s32.totalorder %s26, 0
      %p131 = por %p129, %p130
      %p132 = scmp.ne.s32.totalorder %s120, %s121
      %p133 = scmp.eq.s32.totalorder %s27, 1
      %p134 = por %p132, %p133
      %p136 = scmp.ne.s32.totalorder %s121, %s135
      %p137 = scmp.eq.s32.totalorder %s27, 0
      %p138 = por %p136, %p137
      %s140 = sadd.s32 %s139, 1
      %p143 = scmp.eq.s32.totalorder %s21, 1
      %p144 = scmp.ne.s32.totalorder %s139, %s141
      %p145 = scmp.eq.s32.totalorder %s21, 0
      %p146 = por %p144, %p145
      %p147 = scmp.ne.s32.totalorder %s139, %s141
      %p148 = scmp.eq.s32.totalorder %s26, 1
      %p149 = por %p147, %p148
      %p150 = scmp.ne.s32.totalorder %s141, %s142
      %p151 = scmp.eq.s32.totalorder %s26, 0
      %p152 = por %p150, %p151
      %p153 = scmp.ne.s32.totalorder %s141, %s142
      %p154 = scmp.eq.s32.totalorder %s27, 1
      %p155 = por %p153, %p154
      %p157 = scmp.ne.s32.totalorder %s142, %s156
      %p158 = scmp.eq.s32.totalorder %s27, 0
      %p159 = por %p157, %p158
      %s161 = sadd.s32 %s160, 1
      %p164 = scmp.eq.s32.totalorder %s21, 1
      %p165 = scmp.ne.s32.totalorder %s160, %s162
      %p166 = scmp.eq.s32.totalorder %s21, 0
      %p167 = por %p165, %p166
      %p168 = scmp.ne.s32.totalorder %s160, %s162
      %p169 = scmp.eq.s32.totalorder %s26, 1
      %p170 = por %p168, %p169
      %p171 = scmp.ne.s32.totalorder %s162, %s163
      %p172 = scmp.eq.s32.totalorder %s26, 0
      %p173 = por %p171, %p172
      %p174 = scmp.ne.s32.totalorder %s162, %s163
      %p175 = scmp.eq.s32.totalorder %s27, 1
      %p176 = por %p174, %p175
      %p178 = scmp.ne.s32.totalorder %s163, %s177
      %p179 = scmp.eq.s32.totalorder %s27, 0
      %p180 = por %p178, %p179
      %s182 = sadd.s32 %s181, 1
      %p185 = scmp.eq.s32.totalorder %s21, 1
      %p186 = scmp.ne.s32.totalorder %s181, %s183
      %p187 = scmp.eq.s32.totalorder %s21, 0
      %p188 = por %p186, %p187
      %p189 = scmp.ne.s32.totalorder %s181, %s183
      %p190 = scmp.eq.s32.totalorder %s26, 1
      %p191 = por %p189, %p190
      %p192 = scmp.ne.s32.totalorder %s183, %s184
      %p193 = scmp.eq.s32.totalorder %s26, 0
      %p194 = por %p192, %p193
      %p195 = scmp.ne.s32.totalorder %s183, %s184
      %p196 = scmp.eq.s32.totalorder %s27, 1
      %p197 = por %p195, %p196
      %p199 = scmp.ne.s32.totalorder %s184, %s198
      %p200 = scmp.eq.s32.totalorder %s27, 0
      %p201 = por %p199, %p200
      %s203 = sadd.s32 %s202, 1
      %p206 = scmp.eq.s32.totalorder %s21, 1
      %p207 = scmp.ne.s32.totalorder %s202, %s204
      %p208 = scmp.eq.s32.totalorder %s21, 0
      %p209 = por %p207, %p208
      %p210 = scmp.ne.s32.totalorder %s202, %s204
      %p211 = scmp.eq.s32.totalorder %s26, 1
      %p212 = por %p210, %p211
      %p213 = scmp.ne.s32.totalorder %s204, %s205
      %p214 = scmp.eq.s32.totalorder %s26, 0
      %p215 = por %p213, %p214
      %p216 = scmp.ne.s32.totalorder %s204, %s205
      %p217 = scmp.eq.s32.totalorder %s27, 1
      %p218 = por %p216, %p217
      %p220 = scmp.ne.s32.totalorder %s205, %s219
      %p221 = scmp.eq.s32.totalorder %s27, 0
      %p222 = por %p220, %p221
      %s224 = sadd.s32 %s223, 1
      %p227 = scmp.eq.s32.totalorder %s21, 1
      %p228 = scmp.ne.s32.totalorder %s223, %s225
      %p229 = scmp.eq.s32.totalorder %s21, 0
      %p230 = por %p228, %p229
      %p231 = scmp.ne.s32.totalorder %s223, %s225
      %p232 = scmp.eq.s32.totalorder %s26, 1
      %p233 = por %p231, %p232
      %p234 = scmp.ne.s32.totalorder %s225, %s226
      %p235 = scmp.eq.s32.totalorder %s26, 0
      %p236 = por %p234, %p235
      %p237 = scmp.ne.s32.totalorder %s225, %s226
      %p238 = scmp.eq.s32.totalorder %s27, 1
      %p239 = por %p237, %p238
      %p241 = scmp.ne.s32.totalorder %s226, %s240
      %p242 = scmp.eq.s32.totalorder %s27, 0
      %p243 = por %p241, %p242
      %s245 = sadd.s32 %s244, 1
      %p248 = scmp.eq.s32.totalorder %s21, 1
      %p249 = scmp.ne.s32.totalorder %s244, %s246
      %p250 = scmp.eq.s32.totalorder %s21, 0
      %p251 = por %p249, %p250
      %p252 = scmp.ne.s32.totalorder %s244, %s246
      %p253 = scmp.eq.s32.totalorder %s26, 1
      %p254 = por %p252, %p253
      %p255 = scmp.ne.s32.totalorder %s246, %s247
      %p256 = scmp.eq.s32.totalorder %s26, 0
      %p257 = por %p255, %p256
      %p258 = scmp.ne.s32.totalorder %s246, %s247
      %p259 = scmp.eq.s32.totalorder %s27, 1
      %p260 = por %p258, %p259
      %p262 = scmp.ne.s32.totalorder %s247, %s261
      %p263 = scmp.eq.s32.totalorder %s27, 0
      %p264 = por %p262, %p263
      %s265 = ssub.s32 %s21, %s28
      %p266 = scmp.eq.s32.totalorder %s265, 0
      %s268 = sadd.s32 %s267, 1
      %s269 = scalar_select %p266, %s267, %s268
      %p272 = pneg %p266
      %p273 = scmp.eq.s32.totalorder %s21, 1
      %p274 = por %p272, %p273
      %p275 = scmp.ne.s32.totalorder %s267, %s270
      %p276 = scmp.eq.s32.totalorder %s21, 0
      %p277 = por %p275, %p276
      %p278 = scmp.ne.s32.totalorder %s267, %s270
      %p279 = scmp.eq.s32.totalorder %s26, 1
      %p280 = por %p278, %p279
      %p281 = scmp.ne.s32.totalorder %s270, %s271
      %p282 = scmp.eq.s32.totalorder %s26, 0
      %p283 = por %p281, %p282
      %p284 = scmp.ne.s32.totalorder %s270, %s271
      %p285 = scmp.eq.s32.totalorder %s27, 1
      %p286 = por %p284, %p285
      %p288 = scmp.ne.s32.totalorder %s271, %s287
      %p289 = scmp.eq.s32.totalorder %s27, 0
      %p290 = por %p288, %p289
      %p291 = scmp.le.s32.totalorder 1, %s21
      %p292 = scmp.lt.s32.totalorder %s21, 3
      %p293 = pnand %p291, %p292
      %p294 = pneg %p293
      // Predicated region
      $region9: #{_lambda_.1} parent=5 // pred_check
        _
      $region10: #{_lambda_.1} parent=5 // pred_check_branch
        %296 = sbr.rel (%p293) target = $region12
      $region11: #{_lambda_.1} parent=5 // pred_region
        %s297 = ssub.s32 %s21, 1
        // Predicated region
        $region13: #{_lambda_.1} parent=11 // pred_check
          %p298 = pneg %p68
        $region14: #{_lambda_.1} parent=11 // pred_check_branch
          %300 = sbr.rel (%p298) target = $region16
        $region15: #{_lambda_.1} parent=11 // pred_region
          %s302 = ssub.s32 5376, 5376
          %303 = vsyncadd [#allocation3], %s302
          %s304 = sshll.u32 [#allocation2], 4
          %s305 = int_to_ptr.vmem [resolvable:$true] %s304
          %310 = dma.hbm_to_vmem [thread:$0]  %s1, 5376, %s305, [#allocation3], 384, 384, 24
        $region16: #{_lambda_.1} parent=11 // pred_fallthru
          _
        // Predicated region
        $region17: #{_lambda_.1} parent=11 // pred_check
          %p311 = pneg %p89
        $region18: #{_lambda_.1} parent=11 // pred_check_branch
          %313 = sbr.rel (%p311) target = $region20
        $region19: #{_lambda_.1} parent=11 // pred_region
          _
        $region20: #{_lambda_.1} parent=11 // pred_fallthru
          _
        // Predicated region
        $region21: #{_lambda_.1} parent=11 // pred_check
          %p314 = pneg %p110
        $region22: #{_lambda_.1} parent=11 // pred_check_branch
          %316 = sbr.rel (%p314) target = $region24
        $region23: #{_lambda_.1} parent=11 // pred_region
          _
        $region24: #{_lambda_.1} parent=11 // pred_fallthru
          _
        // Predicated region
        $region25: #{_lambda_.1} parent=11 // pred_check
          %p317 = pneg %p131
        $region26: #{_lambda_.1} parent=11 // pred_check_branch
          %319 = sbr.rel (%p317) target = $region28
        $region27: #{_lambda_.1} parent=11 // pred_region
          _
        $region28: #{_lambda_.1} parent=11 // pred_fallthru
          _
        // Predicated region
        $region29: #{_lambda_.1} parent=11 // pred_check
          %p320 = pneg %p152
        $region30: #{_lambda_.1} parent=11 // pred_check_branch
          %322 = sbr.rel (%p320) target = $region32
        $region31: #{_lambda_.1} parent=11 // pred_region
          _
        $region32: #{_lambda_.1} parent=11 // pred_fallthru
          _
        // Predicated region
        $region33: #{_lambda_.1} parent=11 // pred_check
          %p323 = pneg %p173
        $region34: #{_lambda_.1} parent=11 // pred_check_branch
          %325 = sbr.rel (%p323) target = $region36
        $region35: #{_lambda_.1} parent=11 // pred_region
          _
        $region36: #{_lambda_.1} parent=11 // pred_fallthru
          _
        // Predicated region
        $region37: #{_lambda_.1} parent=11 // pred_check
          %p326 = pneg %p194
        $region38: #{_lambda_.1} parent=11 // pred_check_branch
          %328 = sbr.rel (%p326) target = $region40
        $region39: #{_lambda_.1} parent=11 // pred_region
          _
        $region40: #{_lambda_.1} parent=11 // pred_fallthru
          _
        // Predicated region
        $region41: #{_lambda_.1} parent=11 // pred_check
          %p329 = pneg %p215
        $region42: #{_lambda_.1} parent=11 // pred_check_branch
          %331 = sbr.rel (%p329) target = $region44
        $region43: #{_lambda_.1} parent=11 // pred_region
          _
        $region44: #{_lambda_.1} parent=11 // pred_fallthru
          _
        // Predicated region
        $region45: #{_lambda_.1} parent=11 // pred_check
          %p332 = pneg %p236
        $region46: #{_lambda_.1} parent=11 // pred_check_branch
          %334 = sbr.rel (%p332) target = $region48
        $region47: #{_lambda_.1} parent=11 // pred_region
          _
        $region48: #{_lambda_.1} parent=11 // pred_fallthru
          _
        // Predicated region
        $region49: #{_lambda_.1} parent=11 // pred_check
          %p335 = pneg %p257
        $region50: #{_lambda_.1} parent=11 // pred_check_branch
          %337 = sbr.rel (%p335) target = $region52
        $region51: #{_lambda_.1} parent=11 // pred_region
          _
        $region52: #{_lambda_.1} parent=11 // pred_fallthru
          _
      $region12: #{_lambda_.1} parent=5 // pred_fallthru
        _
      %p338 = scmp.lt.s32.totalorder %s21, 2
      // Predicated region
      $region53: #{_lambda_.1} parent=5 // pred_check
        %p339 = pneg %p338
      $region54: #{_lambda_.1} parent=5 // pred_check_branch
        %341 = sbr.rel (%p339) target = $region56
      $region55: #{_lambda_.1} parent=5 // pred_region
        // Predicated region
        $region57: #{_lambda_.1} parent=55 // pred_check
          %p342 = pneg %p41
        $region58: #{_lambda_.1} parent=55 // pred_check_branch
          %344 = sbr.rel (%p342) target = $region60
        $region59: #{_lambda_.1} parent=55 // pred_region
          %p345 = scmp.lt.s32.totalorder %s21, 1
          %s346 = scalar_select %p345, %s21, 1
          %s347 = smul.addr %s346, 4
          %s348 = smul.addr %s347, 8
          %s349 = scalar_lea.vmem %s0, %s348
        $region60: #{_lambda_.1} parent=55 // pred_fallthru
          _
      $region56: #{_lambda_.1} parent=5 // pred_fallthru
        _
      %p350 = scmp.le.s32.totalorder 1, %s21
      %p351 = scmp.lt.s32.totalorder %s21, 3
      %p352 = pnand %p350, %p351
      %p353 = pneg %p352
      // Predicated region
      $region61: #{_lambda_.1} parent=5 // pred_check
        _
      $region62: #{_lambda_.1} parent=5 // pred_check_branch
        %355 = sbr.rel (%p352) target = $region64
      $region63: #{_lambda_.1} parent=5 // pred_region
        %s356 = ssub.s32 %s21, 1
        // Predicated region
        $region65: #{_lambda_.1} parent=63 // pred_check
          %p357 = pneg %p68
        $region66: #{_lambda_.1} parent=63 // pred_check_branch
          %359 = sbr.rel (%p357) target = $region68
        $region67: #{_lambda_.1} parent=63 // pred_region
          %360 = dma.done [#allocation3], 5376
        $region68: #{_lambda_.1} parent=63 // pred_fallthru
          _
        %p361 = scmp.lt.s32.totalorder %s26, 1
        %s362 = scalar_select %p361, %s26, 1
        %s363 = smul.addr %s362, 4
        %s364 = smul.addr %s363, 8
        %s365 = scalar_lea.vmem %s0, %s364
        %p366 = pneg %p47
        %p367 = pneg %p44
        %p368 = pneg %p68
        %p369 = pneg %p65
        %p370 = pneg %p89
        %p371 = pneg %p86
        %p372 = pneg %p110
        %p373 = pneg %p107
        %p374 = pneg %p131
        %p375 = pneg %p128
        %p376 = pneg %p152
        %p377 = pneg %p149
        %p378 = pneg %p173
        %p379 = pneg %p170
        %p380 = pneg %p194
        %p381 = pneg %p191
        %p382 = pneg %p215
        %p383 = pneg %p212
        %p384 = pneg %p236
        %p385 = pneg %p233
        %p386 = pneg %p257
        %p387 = pneg %p254
        %p388 = pneg %p283
        %p389 = pneg %p280
        %s390 = sand.u32 %s270, 1
        %s391 = scalar_lea.sflag [#allocation4], %s390
        %s392 = sand.u32 %s270, 1
        %s393 = smul.addr %s392, 2
        %s394 = scalar_lea.vmem [#allocation5], %s393
        %p395 = scmp.lt.s32.totalorder %s26, 1
        %s396 = scalar_select %p395, %s26, 1
        %s397 = smul.addr %s396, 4
        %s398 = smul.addr %s397, 8
        %s399 = scalar_lea.vmem %s0, %s398
        %v400 = vld [vmem:[%s399] sm:$0xff]
        %v401 = vld [vmem:[%s399 + $0x8] sm:$0xff]
        %v402 = vld [vmem:[%s399 + $0x10] sm:$0xff]
        %v403 = vld [vmem:[%s399 + $0x18] sm:$0xff]
        %v404 = vld [vmem:[#allocation2] sm:$0xff]
        %v405 = vld [vmem:[#allocation2 + $0x8] sm:$0xff]
        %v406 = vld [vmem:[#allocation2 + $0x10] sm:$0xff]
        %v407 = vld [vmem:[#allocation2 + $0x18] sm:$0xff]
        %v408 = vld [vmem:[#allocation2 + $0x20] sm:$0xff]
        %v409 = vld [vmem:[#allocation2 + $0x28] sm:$0xff]
        %v410 = vld [vmem:[#allocation2 + $0x30] sm:$0xff]
        %v411 = vld [vmem:[#allocation2 + $0x38] sm:$0xff]
        %v412 = vld [vmem:[#allocation2 + $0x40] sm:$0xff]
        %v413 = vld [vmem:[#allocation2 + $0x48] sm:$0xff]
        %v414 = vld [vmem:[#allocation2 + $0x50] sm:$0xff]
        %v415 = vld [vmem:[#allocation2 + $0x58] sm:$0xff]
        %v416 = vld [vmem:[#allocation2 + $0x60] sm:$0xff]
        %v417 = vld [vmem:[#allocation2 + $0x68] sm:$0xff]
        %v418 = vld [vmem:[#allocation2 + $0x70] sm:$0xff]
        %v419 = vld [vmem:[#allocation2 + $0x78] sm:$0xff]
        %v420 = vld [vmem:[#allocation2 + $0x80] sm:$0xff]
        %v421 = vld [vmem:[#allocation2 + $0x88] sm:$0xff]
        %v422 = vld [vmem:[#allocation2 + $0x90] sm:$0xff]
        %v423 = vld [vmem:[#allocation2 + $0x98] sm:$0xff]
        %v424 = vld [vmem:[#allocation2 + $0xa0] sm:$0xff]
        %v425 = vld [vmem:[#allocation2 + $0xa8] sm:$0xff]
        %v426 = vld [vmem:[#allocation2 + $0xb0] sm:$0xff]
        %v427 = vld [vmem:[#allocation2 + $0xb8] sm:$0xff]
        %v428 = vld [vmem:[#allocation2 + $0xc0] sm:$0xff]
        %v429 = vld [vmem:[#allocation2 + $0xc8] sm:$0xff]
        %v430 = vld [vmem:[#allocation2 + $0xd0] sm:$0xff]
        %v431 = vld [vmem:[#allocation2 + $0xd8] sm:$0xff]
        %v432 = vld [vmem:[#allocation2 + $0xe0] sm:$0xff]
        %v433 = vld [vmem:[#allocation2 + $0xe8] sm:$0xff]
        %v434 = vld [vmem:[#allocation2 + $0xf0] sm:$0xff]
        %v435 = vld [vmem:[#allocation2 + $0xf8] sm:$0xff]
        %v436 = vld [vmem:[#allocation2 + $0x100] sm:$0xff]
        %v437 = vld [vmem:[#allocation2 + $0x108] sm:$0xff]
        %v438 = vld [vmem:[#allocation2 + $0x110] sm:$0xff]
        %v439 = vld [vmem:[#allocation2 + $0x118] sm:$0xff]
        %v440 = vld [vmem:[#allocation2 + $0x120] sm:$0xff]
        %v441 = vld [vmem:[#allocation2 + $0x128] sm:$0xff]
        %v442 = vld [vmem:[#allocation2 + $0x130] sm:$0xff]
        %v443 = vld [vmem:[#allocation2 + $0x138] sm:$0xff]
        %v444 = vld [vmem:[#allocation2 + $0x140] sm:$0xff]
        %v445 = vld [vmem:[#allocation2 + $0x148] sm:$0xff]
        %v446 = vld [vmem:[%s2] sm:$0x7]
        %v448 = vlaneseq
        %v449 = vshrl.u32 %v448, 7
        %v450 = vsub.s32 0, %v449
        %v451 = vrot.slane %v446, %v450
        %v452 = vlaneseq
        %v453 = vshrl.u32 %v452, 7
        %v454 = vsub.s32 1, %v453
        %v455 = vrot.slane %v446, %v454
        %v456 = vlaneseq
        %v457 = vshrl.u32 %v456, 7
        %v458 = vsub.s32 2, %v457
        %v459 = vrot.slane %v446, %v458
        %vm463 = vcmask 916480
        %v465 = vsel %vm463, %v400, 0
        %v468 = vsel %vm463, %v401, 0
        %v471 = vsel %vm463, %v402, 0
        %v474 = vsel %vm463, %v403, 0
        %476 = vmatprep.subr.mxu0 %v405
        %477 = vmatpush1.msra.mxu0 %v404
        %478 = vmatprep.subr.mxu0 %v408
        %479 = vmatpush1.msra.mxu0 %v407
        %480 = vmatprep.subr.mxu0 %v411
        %481 = vmatpush1.msra.mxu0 %v410
        %482 = vmatprep.subr.mxu0 %v414
        %483 = vmatpush1.msra.mxu0 %v413
        %484 = vmatprep.subr.mxu0 %v417
        %485 = vmatpush1.msra.mxu0 %v416
        %486 = vmatprep.subr.mxu0 %v420
        %487 = vmatpush1.msra.mxu0 %v419
        %488 = vmatprep.subr.mxu0 %v423
        %489 = vmatpush1.msra.mxu0 %v422
        %490 = vmatprep.subr.mxu0 %v426
        %491 = vmatpush1.msra.mxu0 %v425
        %492 = vmatprep.subr.mxu0 %v429
        %493 = vmatpush1.msra.mxu0 %v428
        %494 = vmatprep.subr.mxu0 %v432
        %495 = vmatpush1.msra.mxu0 %v431
        %496 = vmatprep.subr.mxu0 %v435
        %497 = vmatpush1.msra.mxu0 %v434
        %498 = vmatprep.subr.mxu0 %v438
        %499 = vmatpush1.msra.mxu0 %v437
        %500 = vmatprep.subr.mxu0 %v441
        %501 = vmatpush1.msra.mxu0 %v440
        %502 = vmatprep.subr.mxu0 %v444
        %503 = vmatpush1.msra.mxu0 %v443
        %504 = vmatprep.subr.mxu0 0.0
        %505 = vmatpush1.msra.mxu0 0.0
        %506 = vmatprep.subr.mxu0 0.0
        %507 = vmatpush1.msra.mxu0 0.0
        %508 = vmatprep.subr.mxu0 0.0
        %509 = vmatpush1.msra.mxu0 0.0
        %510 = vmatprep.subr.mxu0 0.0
        %511 = vmatpush1.msra.mxu0 0.0
        %512 = vmatprep.subr.mxu0 0.0
        %513 = vmatpush1.msra.mxu0 0.0
        %514 = vmatprep.subr.mxu0 0.0
        %515 = vmatpush1.msra.mxu0 0.0
        %516 = vmatprep.subr.mxu0 0.0
        %517 = vmatpush1.msra.mxu0 0.0
        %518 = vmatprep.subr.mxu0 0.0
        %519 = vmatpush1.msra.mxu0 0.0
        %520 = vmatprep.subr.mxu0 0.0
        %521 = vmatpush1.msra.mxu0 0.0
        %522 = vmatprep.subr.mxu0 0.0
        %523 = vmatpush1.msra.mxu0 0.0
        %524 = vmatprep.subr.mxu0 0.0
        %525 = vmatpush1.msra.mxu0 0.0
        %526 = vmatprep.subr.mxu0 0.0
        %527 = vmatpush1.msra.mxu0 0.0
        %528 = vmatprep.subr.mxu0 0.0
        %529 = vmatpush1.msra.mxu0 0.0
        %530 = vmatprep.subr.mxu0 0.0
        %531 = vmatpush1.msra.mxu0 0.0
        %532 = vmatprep.subr.mxu0 0.0
        %533 = vmatpush1.msra.mxu0 0.0
        %534 = vmatprep.subr.mxu0 0.0
        %535 = vmatpush1.msra.mxu0 0.0
        %536 = vmatprep.subr.mxu0 0.0
        %537 = vmatpush1.msra.mxu0 0.0
        %538 = vmatprep.subr.mxu0 0.0
        %539 = vmatpush1.msra.mxu0 0.0
        %540 = vmatprep.mubr.f32.mxu0 0.0
        %541 = vmatmul.mubr.f32.gmra.mrb[0].mxu0 %v465
        %v542 = vpop.f32.mrb[0].mxu0
        %v543 = vadd.f32 %v451, %v542
        %v544 = vpop.f32.mrb[0].mxu0
        %v545 = vadd.f32 %v455, %v544
        %546 = vmatprep.mubr.f32.mxu0 0.0
        %547 = vmatmul.mubr.f32.gmra.mrb[0].mxu0 %v468
        %v548 = vpop.f32.mrb[0].mxu0
        %v549 = vadd.f32 %v451, %v548
        %v550 = vpop.f32.mrb[0].mxu0
        %v551 = vadd.f32 %v455, %v550
        %552 = vmatprep.mubr.f32.mxu0 0.0
        %553 = vmatmul.mubr.f32.gmra.mrb[0].mxu0 %v471
        %v554 = vpop.f32.mrb[0].mxu0
        %v555 = vadd.f32 %v451, %v554
        %v556 = vpop.f32.mrb[0].mxu0
        %v557 = vadd.f32 %v455, %v556
        %558 = vmatprep.mubr.f32.mxu0 0.0
        %559 = vmatmul.mubr.f32.gmra.mrb[0].mxu0 %v474
        %v560 = vpop.f32.mrb[0].mxu0
        %v561 = vadd.f32 %v451, %v560
        %v562 = vpop.f32.mrb[0].mxu0
        %v563 = vadd.f32 %v455, %v562
        %564 = vdwg.mxu0
        %565 = vmatprep.subr.mxu0 0.0
        %566 = vmatpush1.msra.mxu0 %v406
        %567 = vmatprep.subr.mxu0 0.0
        %568 = vmatpush1.msra.mxu0 %v409
        %569 = vmatprep.subr.mxu0 0.0
        %570 = vmatpush1.msra.mxu0 %v412
        %571 = vmatprep.subr.mxu0 0.0
        %572 = vmatpush1.msra.mxu0 %v415
        %573 = vmatprep.subr.mxu0 0.0
        %574 = vmatpush1.msra.mxu0 %v418
        %575 = vmatprep.subr.mxu0 0.0
        %576 = vmatpush1.msra.mxu0 %v421
        %577 = vmatprep.subr.mxu0 0.0
        %578 = vmatpush1.msra.mxu0 %v424
        %579 = vmatprep.subr.mxu0 0.0
        %580 = vmatpush1.msra.mxu0 %v427
        %581 = vmatprep.subr.mxu0 0.0
        %582 = vmatpush1.msra.mxu0 %v430
        %583 = vmatprep.subr.mxu0 0.0
        %584 = vmatpush1.msra.mxu0 %v433
        %585 = vmatprep.subr.mxu0 0.0
        %586 = vmatpush1.msra.mxu0 %v436
        %587 = vmatprep.subr.mxu0 0.0
        %588 = vmatpush1.msra.mxu0 %v439
        %589 = vmatprep.subr.mxu0 0.0
        %590 = vmatpush1.msra.mxu0 %v442
        %591 = vmatprep.subr.mxu0 0.0
        %592 = vmatpush1.msra.mxu0 %v445
        %593 = vmatprep.subr.mxu0 0.0
        %594 = vmatpush1.msra.mxu0 0.0
        %595 = vmatprep.subr.mxu0 0.0
        %596 = vmatpush1.msra.mxu0 0.0
        %597 = vmatprep.subr.mxu0 0.0
        %598 = vmatpush1.msra.mxu0 0.0
        %599 = vmatprep.subr.mxu0 0.0
        %600 = vmatpush1.msra.mxu0 0.0
        %601 = vmatprep.subr.mxu0 0.0
        %602 = vmatpush1.msra.mxu0 0.0
        %603 = vmatprep.subr.mxu0 0.0
        %604 = vmatpush1.msra.mxu0 0.0
        %605 = vmatprep.subr.mxu0 0.0
        %606 = vmatpush1.msra.mxu0 0.0
        %607 = vmatprep.subr.mxu0 0.0
        %608 = vmatpush1.msra.mxu0 0.0
        %609 = vmatprep.subr.mxu0 0.0
        %610 = vmatpush1.msra.mxu0 0.0
        %611 = vmatprep.subr.mxu0 0.0
        %612 = vmatpush1.msra.mxu0 0.0
        %613 = vmatprep.subr.mxu0 0.0
        %614 = vmatpush1.msra.mxu0 0.0
        %615 = vmatprep.subr.mxu0 0.0
        %616 = vmatpush1.msra.mxu0 0.0
        %617 = vmatprep.subr.mxu0 0.0
        %618 = vmatpush1.msra.mxu0 0.0
        %619 = vmatprep.subr.mxu0 0.0
        %620 = vmatpush1.msra.mxu0 0.0
        %621 = vmatprep.subr.mxu0 0.0
        %622 = vmatpush1.msra.mxu0 0.0
        %623 = vmatprep.subr.mxu0 0.0
        %624 = vmatpush1.msra.mxu0 0.0
        %625 = vmatprep.subr.mxu0 0.0
        %626 = vmatpush1.msra.mxu0 0.0
        %627 = vmatprep.subr.mxu0 0.0
        %628 = vmatpush1.msra.mxu0 0.0
        %629 = vmatprep.mubr.f32.mxu0 0.0
        %630 = vmatmul.mubr.f32.gmra.mrb[0].mxu0 %v465
        %v631 = vpop.f32.mrb[0].mxu0
        %v632 = vadd.f32 %v459, %v631
        %v633 = vpop.f32.mrb[0].mxu0
        %634 = vmatprep.mubr.f32.mxu0 0.0
        %635 = vmatmul.mubr.f32.gmra.mrb[0].mxu0 %v468
        %v636 = vpop.f32.mrb[0].mxu0
        %v637 = vadd.f32 %v459, %v636
        %v638 = vpop.f32.mrb[0].mxu0
        %639 = vmatprep.mubr.f32.mxu0 0.0
        %640 = vmatmul.mubr.f32.gmra.mrb[0].mxu0 %v471
        %v641 = vpop.f32.mrb[0].mxu0
        %v642 = vadd.f32 %v459, %v641
        %v643 = vpop.f32.mrb[0].mxu0
        %644 = vmatprep.mubr.f32.mxu0 0.0
        %645 = vmatmul.mubr.f32.gmra.mrb[0].mxu0 %v474
        %v646 = vpop.f32.mrb[0].mxu0
        %v647 = vadd.f32 %v459, %v646
        %v648 = vpop.f32.mrb[0].mxu0
        %649 = vdwg.mxu0
        %v650 = vmax.f32 %v543, 0.0
        %v651 = vmax.f32 %v545, 0.0
        %v652 = vmax.f32 %v632, 0.0
        %v653 = vmax.f32 %v549, 0.0
        %v654 = vmax.f32 %v551, 0.0
        %v655 = vmax.f32 %v637, 0.0
        %v656 = vmax.f32 %v555, 0.0
        %v657 = vmax.f32 %v557, 0.0
        %v658 = vmax.f32 %v642, 0.0
        %v659 = vmax.f32 %v561, 0.0
        %v660 = vmax.f32 %v563, 0.0
        %v661 = vmax.f32 %v647, 0.0
        %670 = vrot.lane.b32.xlu0 %v650, 50
        %v671 = vpop.permute.xlu0 %670
        %672 = vrot.lane.b32.xlu0 %v651, 50
        %v673 = vpop.permute.xlu0 %672
        %674 = vrot.lane.b32.xlu0 %v653, 50
        %v675 = vpop.permute.xlu0 %674
        %676 = vrot.lane.b32.xlu0 %v654, 50
        %v677 = vpop.permute.xlu0 %676
        %678 = vrot.lane.b32.xlu0 %v656, 50
        %v679 = vpop.permute.xlu0 %678
        %680 = vrot.lane.b32.xlu0 %v657, 50
        %v681 = vpop.permute.xlu0 %680
        %682 = vrot.lane.b32.xlu0 %v659, 50
        %v683 = vpop.permute.xlu0 %682
        %684 = vrot.lane.b32.xlu0 %v660, 50
        %v685 = vpop.permute.xlu0 %684
        %vm686 = vcmask 408576
        %v687 = vsel %vm686, %v671, %v673
        %v688 = vsel %vm686, %v675, %v677
        %v689 = vsel %vm686, %v679, %v681
        %v690 = vsel %vm686, %v683, %v685
        %v695 = vmax.f32 %v650, %v687
        %v696 = vmax.f32 %v653, %v688
        %v697 = vmax.f32 %v656, %v689
        %v698 = vmax.f32 %v659, %v690
        %703 = vrot.lane.b32.xlu0 %v652, 50
        %v704 = vpop.permute.xlu0 %703
        %705 = vrot.lane.b32.xlu0 %v655, 50
        %v706 = vpop.permute.xlu0 %705
        %707 = vrot.lane.b32.xlu0 %v658, 50
        %v708 = vpop.permute.xlu0 %707
        %709 = vrot.lane.b32.xlu0 %v661, 50
        %v710 = vpop.permute.xlu0 %709
        %v711 = vsel %vm686, %v673, %v704
        %v712 = vsel %vm686, %v677, %v706
        %v713 = vsel %vm686, %v681, %v708
        %v714 = vsel %vm686, %v685, %v710
        %v719 = vmax.f32 %v651, %v711
        %v720 = vmax.f32 %v654, %v712
        %v721 = vmax.f32 %v657, %v713
        %v722 = vmax.f32 %v660, %v714
        %727 = vrot.lane.b32.xlu0 %v719, 100
        %v728 = vpop.permute.xlu0 %727
        %729 = vrot.lane.b32.xlu0 %v720, 100
        %v730 = vpop.permute.xlu0 %729
        %731 = vrot.lane.b32.xlu0 %v721, 100
        %v732 = vpop.permute.xlu0 %731
        %733 = vrot.lane.b32.xlu0 %v722, 100
        %v734 = vpop.permute.xlu0 %733
        %v739 = vmax.f32 %v695, %v728
        %v740 = vmax.f32 %v696, %v730
        %v741 = vmax.f32 %v697, %v732
        %v742 = vmax.f32 %v698, %v734
        %vm747 = vcmask 1046528
        %v748 = vrot.slane %v739, 1
        %v749 = vrot.slane %v740, 1
        %v750 = vsel %vm747, %v748, %v749
        %v751 = vrot.slane %v741, 1
        %v752 = vsel %vm747, %v749, %v751
        %v753 = vrot.slane %v742, 1
        %v754 = vsel %vm747, %v751, %v753
        %755 = vrot.lane.b32.xlu0 %v750, 78
        %v756 = vpop.permute.xlu0 %755
        %757 = vrot.lane.b32.xlu0 %v752, 78
        %v758 = vpop.permute.xlu0 %757
        %759 = vrot.lane.b32.xlu0 %v754, 78
        %v760 = vpop.permute.xlu0 %759
        %761 = vrot.lane.b32.xlu0 %v753, 78
        %v762 = vpop.permute.xlu0 %761
        %vm767 = vcmask 1045504
        %v768 = vrot.slane %v739, 2
        %v769 = vrot.slane %v740, 2
        %v770 = vsel %vm767, %v768, %v769
        %v771 = vrot.slane %v741, 2
        %v772 = vsel %vm767, %v769, %v771
        %v773 = vrot.slane %v742, 2
        %v774 = vsel %vm767, %v771, %v773
        %775 = vrot.lane.b32.xlu0 %v770, 28
        %v776 = vpop.permute.xlu0 %775
        %777 = vrot.lane.b32.xlu0 %v772, 28
        %v778 = vpop.permute.xlu0 %777
        %779 = vrot.lane.b32.xlu0 %v774, 28
        %v780 = vpop.permute.xlu0 %779
        %781 = vrot.lane.b32.xlu0 %v773, 28
        %v782 = vpop.permute.xlu0 %781
        %vm787 = vcmask 637952
        %v788 = vsel %vm787, %v739, %v756
        %v789 = vsel %vm787, %v740, %v758
        %v790 = vsel %vm787, %v741, %v760
        %v791 = vsel %vm787, %v742, %v762
        %vm792 = vcmask 228352
        %v793 = vsel %vm792, %v756, %v776
        %v794 = vsel %vm792, %v758, %v778
        %v795 = vsel %vm792, %v760, %v780
        %v796 = vsel %vm792, %v762, %v782
        %v797 = vld [vmem:[%s3] sm:$0xff]
        %v798 = vld [vmem:[%s3 + $0x8] sm:$0xff]
        %v799 = vld [vmem:[%s3 + $0x10] sm:$0xff]
        %v800 = vld [vmem:[%s3 + $0x18] sm:$0xff]
        %v801 = vld [vmem:[%s3 + $0x20] sm:$0xff]
        %v802 = vld [vmem:[%s3 + $0x28] sm:$0xff]
        %v803 = vld [vmem:[%s3 + $0x30] sm:$0xff]
        %v804 = vld [vmem:[%s3 + $0x38] sm:$0xff]
        %v805 = vld [vmem:[%s3 + $0x40] sm:$0xff]
        %v806 = vld [vmem:[%s3 + $0x48] sm:$0xff]
        %v807 = vld [vmem:[%s3 + $0x50] sm:$0xff]
        %v808 = vld [vmem:[%s3 + $0x58] sm:$0xff]
        %v809 = vld [vmem:[%s3 + $0x60] sm:$0xff]
        %v810 = vld [vmem:[%s3 + $0x68] sm:$0xff]
        %v811 = vld [vmem:[%s3 + $0x70] sm:$0xff]
        %v812 = vld [vmem:[%s3 + $0x78] sm:$0xff]
        %v813 = vld [vmem:[%s3 + $0x80] sm:$0xff]
        %v814 = vld [vmem:[%s3 + $0x88] sm:$0xff]
        %v815 = vld [vmem:[%s3 + $0x90] sm:$0xff]
        %v816 = vld [vmem:[%s3 + $0x98] sm:$0xff]
        %v817 = vld [vmem:[%s3 + $0xa0] sm:$0xff]
        %v818 = vld [vmem:[%s3 + $0xa8] sm:$0xff]
        %v819 = vld [vmem:[%s3 + $0xb0] sm:$0xff]
        %v820 = vld [vmem:[%s3 + $0xb8] sm:$0xff]
        %v821 = vld [vmem:[%s3 + $0xc0] sm:$0xff]
        %v822 = vld [vmem:[%s3 + $0xc8] sm:$0xff]
        %v823 = vld [vmem:[%s3 + $0xd0] sm:$0xff]
        %v824 = vld [vmem:[%s3 + $0xd8] sm:$0xff]
        %v825 = vld [vmem:[%s3 + $0xe0] sm:$0xff]
        %v826 = vld [vmem:[%s3 + $0xe8] sm:$0xff]
        %v827 = vld [vmem:[%s3 + $0xf0] sm:$0xff]
        %v828 = vld [vmem:[%s3 + $0xf8] sm:$0xff]
        %v829 = vld [vmem:[%s3 + $0x100] sm:$0xff]
        %v830 = vld [vmem:[%s3 + $0x108] sm:$0xff]
        %v831 = vld [vmem:[%s3 + $0x110] sm:$0xff]
        %v832 = vld [vmem:[%s3 + $0x118] sm:$0xff]
        %v833 = vld [vmem:[%s3 + $0x120] sm:$0xff]
        %v834 = vld [vmem:[%s3 + $0x128] sm:$0xff]
        %v835 = vld [vmem:[%s3 + $0x130] sm:$0xff]
        %v836 = vld [vmem:[%s3 + $0x138] sm:$0xff]
        %v837 = vld [vmem:[%s3 + $0x140] sm:$0xff]
        %v838 = vld [vmem:[%s3 + $0x148] sm:$0xff]
        %v839 = vld [vmem:[%s3 + $0x150] sm:$0xff]
        %v840 = vld [vmem:[%s3 + $0x158] sm:$0xff]
        %v841 = vld [vmem:[%s3 + $0x160] sm:$0xff]
        %v842 = vld [vmem:[%s3 + $0x168] sm:$0xff]
        %v843 = vld [vmem:[%s3 + $0x170] sm:$0xff]
        %v844 = vld [vmem:[%s3 + $0x178] sm:$0xff]
        %v845 = vld [vmem:[%s3 + $0x180] sm:$0xff]
        %v846 = vld [vmem:[%s3 + $0x188] sm:$0xff]
        %v847 = vld [vmem:[%s3 + $0x190] sm:$0xff]
        %v848 = vld [vmem:[%s3 + $0x198] sm:$0xff]
        %v849 = vld [vmem:[%s3 + $0x1a0] sm:$0xff]
        %v850 = vld [vmem:[%s3 + $0x1a8] sm:$0xff]
        %v851 = vld [vmem:[%s3 + $0x1b0] sm:$0xff]
        %v852 = vld [vmem:[%s3 + $0x1b8] sm:$0xff]
        %v853 = vld [vmem:[%s3 + $0x1c0] sm:$0xff]
        %v854 = vld [vmem:[%s3 + $0x1c8] sm:$0xff]
        %v855 = vld [vmem:[%s3 + $0x1d0] sm:$0x3]
        %v856 = vld [vmem:[%s3 + $0x1d8] sm:$0x3]
        %v857 = vld [vmem:[%s4] sm:$0x3]
        %v859 = vlaneseq
        %v860 = vshrl.u32 %v859, 7
        %v861 = vsub.s32 0, %v860
        %v862 = vrot.slane %v857, %v861
        %v863 = vlaneseq
        %v864 = vshrl.u32 %v863, 7
        %v865 = vsub.s32 1, %v864
        %v866 = vrot.slane %v857, %v865
        %vm869 = vcmask 867328
        %v871 = vsel %vm869, %v793, 0
        %v874 = vsel %vm869, %v794, 0
        %v877 = vsel %vm869, %v795, 0
        %v880 = vsel %vm869, %v796, 0
        %vm882 = vcmask 1041408
        %v884 = vsel %vm882, %v855, 0
        %v887 = vsel %vm882, %v856, 0
        %889 = vmatprep.subr.mxu0 %v798
        %890 = vmatpush1.msra.mxu0 %v797
        %891 = vmatprep.subr.mxu0 %v800
        %892 = vmatpush1.msra.mxu0 %v799
        %893 = vmatprep.subr.mxu0 %v802
        %894 = vmatpush1.msra.mxu0 %v801
        %895 = vmatprep.subr.mxu0 %v804
        %896 = vmatpush1.msra.mxu0 %v803
        %897 = vmatprep.subr.mxu0 %v806
        %898 = vmatpush1.msra.mxu0 %v805
        %899 = vmatprep.subr.mxu0 %v808
        %900 = vmatpush1.msra.mxu0 %v807
        %901 = vmatprep.subr.mxu0 %v810
        %902 = vmatpush1.msra.mxu0 %v809
        %903 = vmatprep.subr.mxu0 %v812
        %904 = vmatpush1.msra.mxu0 %v811
        %905 = vmatprep.subr.mxu0 %v814
        %906 = vmatpush1.msra.mxu0 %v813
        %907 = vmatprep.subr.mxu0 %v816
        %908 = vmatpush1.msra.mxu0 %v815
        %909 = vmatprep.subr.mxu0 %v818
        %910 = vmatpush1.msra.mxu0 %v817
        %911 = vmatprep.subr.mxu0 %v820
        %912 = vmatpush1.msra.mxu0 %v819
        %913 = vmatprep.subr.mxu0 %v822
        %914 = vmatpush1.msra.mxu0 %v821
        %915 = vmatprep.subr.mxu0 %v824
        %916 = vmatpush1.msra.mxu0 %v823
        %917 = vmatprep.subr.mxu0 %v826
        %918 = vmatpush1.msra.mxu0 %v825
        %919 = vmatprep.subr.mxu0 %v828
        %920 = vmatpush1.msra.mxu0 %v827
        %921 = vmatprep.subr.mxu0 %v830
        %922 = vmatpush1.msra.mxu0 %v829
        %923 = vmatprep.subr.mxu0 %v832
        %924 = vmatpush1.msra.mxu0 %v831
        %925 = vmatprep.subr.mxu0 %v834
        %926 = vmatpush1.msra.mxu0 %v833
        %927 = vmatprep.subr.mxu0 %v836
        %928 = vmatpush1.msra.mxu0 %v835
        %929 = vmatprep.subr.mxu0 %v838
        %930 = vmatpush1.msra.mxu0 %v837
        %931 = vmatprep.subr.mxu0 %v840
        %932 = vmatpush1.msra.mxu0 %v839
        %933 = vmatprep.subr.mxu0 %v842
        %934 = vmatpush1.msra.mxu0 %v841
        %935 = vmatprep.subr.mxu0 %v844
        %936 = vmatpush1.msra.mxu0 %v843
        %937 = vmatprep.subr.mxu0 %v846
        %938 = vmatpush1.msra.mxu0 %v845
        %939 = vmatprep.subr.mxu0 %v848
        %940 = vmatpush1.msra.mxu0 %v847
        %941 = vmatprep.subr.mxu0 %v850
        %942 = vmatpush1.msra.mxu0 %v849
        %943 = vmatprep.subr.mxu0 %v852
        %944 = vmatpush1.msra.mxu0 %v851
        %945 = vmatprep.subr.mxu0 %v854
        %946 = vmatpush1.msra.mxu0 %v853
        %947 = vmatprep.subr.mxu0 %v887
        %948 = vmatpush1.msra.mxu0 %v884
        %949 = vmatprep.subr.mxu0 0.0
        %950 = vmatpush1.msra.mxu0 0.0
        %951 = vmatprep.subr.mxu0 0.0
        %952 = vmatpush1.msra.mxu0 0.0
        %953 = vmatprep.mubr.f32.mxu0 %v871
        %954 = vmatmul.mubr.f32.gmra.mrb[0].mxu0 %v788
        %v955 = vpop.f32.mrb[0].mxu0
        %v956 = vadd.f32 %v862, %v955
        %v957 = vpop.f32.mrb[0].mxu0
        %v958 = vadd.f32 %v866, %v957
        %959 = vmatprep.mubr.f32.mxu0 %v874
        %960 = vmatmul.mubr.f32.gmra.mrb[0].mxu0 %v789
        %v961 = vpop.f32.mrb[0].mxu0
        %v962 = vadd.f32 %v862, %v961
        %v963 = vpop.f32.mrb[0].mxu0
        %v964 = vadd.f32 %v866, %v963
        %965 = vmatprep.mubr.f32.mxu0 %v877
        %966 = vmatmul.mubr.f32.gmra.mrb[0].mxu0 %v790
        %v967 = vpop.f32.mrb[0].mxu0
        %v968 = vadd.f32 %v862, %v967
        %v969 = vpop.f32.mrb[0].mxu0
        %v970 = vadd.f32 %v866, %v969
        %971 = vmatprep.mubr.f32.mxu0 %v880
        %972 = vmatmul.mubr.f32.gmra.mrb[0].mxu0 %v791
        %v973 = vpop.f32.mrb[0].mxu0
        %v974 = vadd.f32 %v862, %v973
        %v975 = vpop.f32.mrb[0].mxu0
        %v976 = vadd.f32 %v866, %v975
        %977 = vdwg.mxu0
        %v978 = vmax.f32 %v956, 0.0
        %v979 = vmax.f32 %v958, 0.0
        %v980 = vmax.f32 %v962, 0.0
        %v981 = vmax.f32 %v964, 0.0
        %v982 = vmax.f32 %v968, 0.0
        %v983 = vmax.f32 %v970, 0.0
        %v984 = vmax.f32 %v974, 0.0
        %v985 = vmax.f32 %v976, 0.0
        %994 = vrot.lane.b32.xlu0 %v978, 48
        %v995 = vpop.permute.xlu0 %994
        %996 = vrot.lane.b32.xlu0 %v979, 48
        %v997 = vpop.permute.xlu0 %996
        %998 = vrot.lane.b32.xlu0 %v980, 48
        %v999 = vpop.permute.xlu0 %998
        %1000 = vrot.lane.b32.xlu0 %v981, 48
        %v1001 = vpop.permute.xlu0 %1000
        %1002 = vrot.lane.b32.xlu0 %v982, 48
        %v1003 = vpop.permute.xlu0 %1002
        %1004 = vrot.lane.b32.xlu0 %v983, 48
        %v1005 = vpop.permute.xlu0 %1004
        %1006 = vrot.lane.b32.xlu0 %v984, 48
        %v1007 = vpop.permute.xlu0 %1006
        %1008 = vrot.lane.b32.xlu0 %v985, 48
        %v1009 = vpop.permute.xlu0 %1008
        %vm1010 = vcmask 392192
        %v1011 = vsel %vm1010, %v995, %v997
        %v1012 = vsel %vm1010, %v999, %v1001
        %v1013 = vsel %vm1010, %v1003, %v1005
        %v1014 = vsel %vm1010, %v1007, %v1009
        %v1019 = vmax.f32 %v978, %v1011
        %v1020 = vmax.f32 %v980, %v1012
        %v1021 = vmax.f32 %v982, %v1013
        %v1022 = vmax.f32 %v984, %v1014
        %v1024 = vrot.slane %v1019, 1
        %v1026 = vmax.f32 %v1019, %v1024
        %v1028 = vrot.slane %v1020, 1
        %v1030 = vmax.f32 %v1020, %v1028
        %v1032 = vrot.slane %v1026, 2
        %1033 = vrot.lane.b32.xlu0 %v1032, 80
        %v1034 = vpop.permute.xlu0 %1033
        %v1036 = vrot.slane %v1026, 4
        %1037 = vrot.lane.b32.xlu0 %v1036, 32
        %v1038 = vpop.permute.xlu0 %1037
        %v1040 = vrot.slane %v1026, 6
        %1041 = vrot.lane.b32.xlu0 %v1040, 112
        %v1042 = vpop.permute.xlu0 %1041
        %1045 = vrot.lane.b32.xlu0 %v1030, 64
        %v1046 = vpop.permute.xlu0 %1045
        %vm1048 = vcmask 654336
        %v1049 = vsel %vm1048, %v1026, %v1034
        %vm1050 = vcmask 261120
        %v1051 = vsel %vm1050, %v1034, %v1038
        %v1052 = vsel %vm463, %v1051, %v1042
        %vm1053 = vcmask 523264
        %v1054 = vsel %vm1053, %v1042, %v1046
        %v1056 = vrot.slane %v1021, 1
        %v1058 = vmax.f32 %v1021, %v1056
        %v1060 = vrot.slane %v1022, 1
        %v1062 = vmax.f32 %v1022, %v1060
        %v1064 = vrot.slane %v1058, 2
        %1065 = vrot.lane.b32.xlu0 %v1064, 80
        %v1066 = vpop.permute.xlu0 %1065
        %v1068 = vrot.slane %v1058, 4
        %1069 = vrot.lane.b32.xlu0 %v1068, 32
        %v1070 = vpop.permute.xlu0 %1069
        %v1072 = vrot.slane %v1058, 6
        %1073 = vrot.lane.b32.xlu0 %v1072, 112
        %v1074 = vpop.permute.xlu0 %1073
        %1077 = vrot.lane.b32.xlu0 %v1062, 64
        %v1078 = vpop.permute.xlu0 %1077
        %v1080 = vsel %vm1048, %v1058, %v1066
        %v1081 = vsel %vm1050, %v1066, %v1070
        %v1082 = vsel %vm463, %v1081, %v1074
        %v1083 = vsel %vm1053, %v1074, %v1078
        %v1087 = vrot.slane %v1080, 7
        %v1088 = vrot.slane %v1082, 7
        %v1089 = vrot.slane %v1083, 7
        %v1090 = vrot.slane %v1078, 7
        %vm1095 = vcmask 1040384
        %v1096 = vsel %vm1095, %v1049, %v1087
        %v1097 = vsel %vm1095, %v1052, %v1088
        %v1098 = vsel %vm1095, %v1054, %v1089
        %v1099 = vsel %vm1095, %v1046, %v1090
        %v1100 = vld [vmem:[%s5] sm:$0xff]
        %v1101 = vld [vmem:[%s5 + $0x8] sm:$0xff]
        %v1102 = vld [vmem:[%s5 + $0x10] sm:$0xff]
        %v1103 = vld [vmem:[%s5 + $0x18] sm:$0xff]
        %v1104 = vld [vmem:[%s5 + $0x20] sm:$0xff]
        %v1105 = vld [vmem:[%s5 + $0x28] sm:$0xff]
        %v1106 = vld [vmem:[%s5 + $0x30] sm:$0xff]
        %v1107 = vld [vmem:[%s5 + $0x38] sm:$0xff]
        %v1108 = vld [vmem:[%s5 + $0x40] sm:$0xff]
        %v1109 = vld [vmem:[%s5 + $0x48] sm:$0xff]
        %v1110 = vld [vmem:[%s5 + $0x50] sm:$0xff]
        %v1111 = vld [vmem:[%s5 + $0x58] sm:$0xff]
        %v1112 = vld [vmem:[%s5 + $0x60] sm:$0xff]
        %v1113 = vld [vmem:[%s5 + $0x68] sm:$0xff]
        %v1114 = vld [vmem:[%s5 + $0x70] sm:$0xff]
        %v1115 = vld [vmem:[%s5 + $0x78] sm:$0xff]
        %v1116 = vld [vmem:[%s5 + $0x80] sm:$0xff]
        %v1117 = vld [vmem:[%s5 + $0x88] sm:$0xff]
        %v1118 = vld [vmem:[%s5 + $0x90] sm:$0xff]
        %v1119 = vld [vmem:[%s5 + $0x98] sm:$0xff]
        %v1120 = vld [vmem:[%s5 + $0xa0] sm:$0xff]
        %v1121 = vld [vmem:[%s5 + $0xa8] sm:$0xff]
        %v1122 = vld [vmem:[%s5 + $0xb0] sm:$0xff]
        %v1123 = vld [vmem:[%s5 + $0xb8] sm:$0xff]
        %v1124 = vld [vmem:[%s5 + $0xc0] sm:$0xff]
        %v1125 = vld [vmem:[%s5 + $0xc8] sm:$0xff]
        %v1126 = vld [vmem:[%s5 + $0xd0] sm:$0xff]
        %v1127 = vld [vmem:[%s5 + $0xd8] sm:$0xff]
        %v1128 = vld [vmem:[%s5 + $0xe0] sm:$0xff]
        %v1129 = vld [vmem:[%s5 + $0xe8] sm:$0xff]
        %v1130 = vld [vmem:[%s5 + $0xf0] sm:$0xff]
        %v1131 = vld [vmem:[%s5 + $0xf8] sm:$0xff]
        %v1132 = vld [vmem:[%s5 + $0x100] sm:$0xff]
        %v1133 = vld [vmem:[%s5 + $0x108] sm:$0xff]
        %v1134 = vld [vmem:[%s5 + $0x110] sm:$0xff]
        %v1135 = vld [vmem:[%s5 + $0x118] sm:$0xff]
        %v1136 = vld [vmem:[%s5 + $0x120] sm:$0xff]
        %v1137 = vld [vmem:[%s5 + $0x128] sm:$0xff]
        %v1138 = vld [vmem:[%s5 + $0x130] sm:$0xff]
        %v1139 = vld [vmem:[%s5 + $0x138] sm:$0xff]
        %v1140 = vld [vmem:[%s5 + $0x140] sm:$0xff]
        %v1141 = vld [vmem:[%s5 + $0x148] sm:$0xff]
        %v1142 = vld [vmem:[%s5 + $0x150] sm:$0xff]
        %v1143 = vld [vmem:[%s5 + $0x158] sm:$0xff]
        %v1144 = vld [vmem:[%s5 + $0x160] sm:$0xff]
        %v1145 = vld [vmem:[%s5 + $0x168] sm:$0xff]
        %v1146 = vld [vmem:[%s5 + $0x170] sm:$0xff]
        %v1147 = vld [vmem:[%s5 + $0x178] sm:$0xff]
        %v1148 = vld [vmem:[%s5 + $0x180] sm:$0xff]
        %v1149 = vld [vmem:[%s5 + $0x188] sm:$0xff]
        %v1150 = vld [vmem:[%s6] sm:$0x1]
        %v1152 = vlaneseq
        %v1153 = vshrl.u32 %v1152, 7
        %v1154 = vsub.s32 0, %v1153
        %v1155 = vrot.slane %v1150, %v1154
        %vm1157 = vcmask 130048
        %v1159 = vsel %vm1157, %v1099, 0
        %1161 = vmatprep.subr.mxu0 0.0
        %1162 = vmatpush1.msra.mxu0 %v1100
        %1163 = vmatprep.subr.mxu0 0.0
        %1164 = vmatpush1.msra.mxu0 %v1101
        %1165 = vmatprep.subr.mxu0 0.0
        %1166 = vmatpush1.msra.mxu0 %v1102
        %1167 = vmatprep.subr.mxu0 0.0
        %1168 = vmatpush1.msra.mxu0 %v1103
        %1169 = vmatprep.subr.mxu0 0.0
        %1170 = vmatpush1.msra.mxu0 %v1104
        %1171 = vmatprep.subr.mxu0 0.0
        %1172 = vmatpush1.msra.mxu0 %v1105
        %1173 = vmatprep.subr.mxu0 0.0
        %1174 = vmatpush1.msra.mxu0 %v1106
        %1175 = vmatprep.subr.mxu0 0.0
        %1176 = vmatpush1.msra.mxu0 %v1107
        %1177 = vmatprep.subr.mxu0 0.0
        %1178 = vmatpush1.msra.mxu0 %v1108
        %1179 = vmatprep.subr.mxu0 0.0
        %1180 = vmatpush1.msra.mxu0 %v1109
        %1181 = vmatprep.subr.mxu0 0.0
        %1182 = vmatpush1.msra.mxu0 %v1110
        %1183 = vmatprep.subr.mxu0 0.0
        %1184 = vmatpush1.msra.mxu0 %v1111
        %1185 = vmatprep.subr.mxu0 0.0
        %1186 = vmatpush1.msra.mxu0 %v1112
        %1187 = vmatprep.subr.mxu0 0.0
        %1188 = vmatpush1.msra.mxu0 %v1113
        %1189 = vmatprep.subr.mxu0 0.0
        %1190 = vmatpush1.msra.mxu0 %v1114
        %1191 = vmatprep.subr.mxu0 0.0
        %1192 = vmatpush1.msra.mxu0 %v1115
        %1193 = vmatprep.subr.mxu0 0.0
        %1194 = vmatpush1.msra.mxu0 %v1116
        %1195 = vmatprep.subr.mxu0 0.0
        %1196 = vmatpush1.msra.mxu0 %v1117
        %1197 = vmatprep.subr.mxu0 0.0
        %1198 = vmatpush1.msra.mxu0 %v1118
        %1199 = vmatprep.subr.mxu0 0.0
        %1200 = vmatpush1.msra.mxu0 %v1119
        %1201 = vmatprep.subr.mxu0 0.0
        %1202 = vmatpush1.msra.mxu0 %v1120
        %1203 = vmatprep.subr.mxu0 0.0
        %1204 = vmatpush1.msra.mxu0 %v1121
        %1205 = vmatprep.subr.mxu0 0.0
        %1206 = vmatpush1.msra.mxu0 %v1122
        %1207 = vmatprep.subr.mxu0 0.0
        %1208 = vmatpush1.msra.mxu0 %v1123
        %1209 = vmatprep.subr.mxu0 0.0
        %1210 = vmatpush1.msra.mxu0 %v1124
        %1211 = vmatprep.subr.mxu0 0.0
        %1212 = vmatpush1.msra.mxu0 %v1125
        %1213 = vmatprep.subr.mxu0 0.0
        %1214 = vmatpush1.msra.mxu0 %v1126
        %1215 = vmatprep.subr.mxu0 0.0
        %1216 = vmatpush1.msra.mxu0 %v1127
        %1217 = vmatprep.subr.mxu0 0.0
        %1218 = vmatpush1.msra.mxu0 %v1128
        %1219 = vmatprep.subr.mxu0 0.0
        %1220 = vmatpush1.msra.mxu0 %v1129
        %1221 = vmatprep.subr.mxu0 0.0
        %1222 = vmatpush1.msra.mxu0 %v1130
        %1223 = vmatprep.subr.mxu0 0.0
        %1224 = vmatpush1.msra.mxu0 %v1131
        %1225 = vmatprep.mubr.f32.mxu0 %v1097
        %1226 = vmatmul.mubr.f32.gmra.mrb[0].mxu0 %v1096
        %v1227 = vpop.f32.mrb[0].mxu0
        %v1228 = vadd.f32 %v1155, %v1227
        %v1229 = vpop.f32.mrb[0].mxu0
        %1230 = vdwg.mxu0
        %1231 = vmatprep.subr.mxu0 0.0
        %1232 = vmatpush1.msra.mxu0 %v1132
        %1233 = vmatprep.subr.mxu0 0.0
        %1234 = vmatpush1.msra.mxu0 %v1133
        %1235 = vmatprep.subr.mxu0 0.0
        %1236 = vmatpush1.msra.mxu0 %v1134
        %1237 = vmatprep.subr.mxu0 0.0
        %1238 = vmatpush1.msra.mxu0 %v1135
        %1239 = vmatprep.subr.mxu0 0.0
        %1240 = vmatpush1.msra.mxu0 %v1136
        %1241 = vmatprep.subr.mxu0 0.0
        %1242 = vmatpush1.msra.mxu0 %v1137
        %1243 = vmatprep.subr.mxu0 0.0
        %1244 = vmatpush1.msra.mxu0 %v1138
        %1245 = vmatprep.subr.mxu0 0.0
        %1246 = vmatpush1.msra.mxu0 %v1139
        %1247 = vmatprep.subr.mxu0 0.0
        %1248 = vmatpush1.msra.mxu0 %v1140
        %1249 = vmatprep.subr.mxu0 0.0
        %1250 = vmatpush1.msra.mxu0 %v1141
        %1251 = vmatprep.subr.mxu0 0.0
        %1252 = vmatpush1.msra.mxu0 %v1142
        %1253 = vmatprep.subr.mxu0 0.0
        %1254 = vmatpush1.msra.mxu0 %v1143
        %1255 = vmatprep.subr.mxu0 0.0
        %1256 = vmatpush1.msra.mxu0 %v1144
        %1257 = vmatprep.subr.mxu0 0.0
        %1258 = vmatpush1.msra.mxu0 %v1145
        %1259 = vmatprep.subr.mxu0 0.0
        %1260 = vmatpush1.msra.mxu0 %v1146
        %1261 = vmatprep.subr.mxu0 0.0
        %1262 = vmatpush1.msra.mxu0 %v1147
        %1263 = vmatprep.subr.mxu0 0.0
        %1264 = vmatpush1.msra.mxu0 %v1148
        %1265 = vmatprep.subr.mxu0 0.0
        %1266 = vmatpush1.msra.mxu0 %v1149
        %1267 = vmatprep.subr.mxu0 0.0
        %1268 = vmatpush1.msra.mxu0 0.0
        %1269 = vmatprep.subr.mxu0 0.0
        %1270 = vmatpush1.msra.mxu0 0.0
        %1271 = vmatprep.subr.mxu0 0.0
        %1272 = vmatpush1.msra.mxu0 0.0
        %1273 = vmatprep.subr.mxu0 0.0
        %1274 = vmatpush1.msra.mxu0 0.0
        %1275 = vmatprep.subr.mxu0 0.0
        %1276 = vmatpush1.msra.mxu0 0.0
        %1277 = vmatprep.subr.mxu0 0.0
        %1278 = vmatpush1.msra.mxu0 0.0
        %1279 = vmatprep.subr.mxu0 0.0
        %1280 = vmatpush1.msra.mxu0 0.0
        %1281 = vmatprep.subr.mxu0 0.0
        %1282 = vmatpush1.msra.mxu0 0.0
        %1283 = vmatprep.subr.mxu0 0.0
        %1284 = vmatpush1.msra.mxu0 0.0
        %1285 = vmatprep.subr.mxu0 0.0
        %1286 = vmatpush1.msra.mxu0 0.0
        %1287 = vmatprep.subr.mxu0 0.0
        %1288 = vmatpush1.msra.mxu0 0.0
        %1289 = vmatprep.subr.mxu0 0.0
        %1290 = vmatpush1.msra.mxu0 0.0
        %1291 = vmatprep.subr.mxu0 0.0
        %1292 = vmatpush1.msra.mxu0 0.0
        %1293 = vmatprep.subr.mxu0 0.0
        %1294 = vmatpush1.msra.mxu0 0.0
        %1295 = vmatprep.mubr.f32.mxu0 %v1159
        %1296 = vmatmul.mubr.f32.gmra.mrb[0].mxu0 %v1098
        %v1297 = vpop.f32.mrb[0].mxu0
        %v1298 = vadd.f32 %v1228, %v1297
        %v1299 = vpop.f32.mrb[0].mxu0
        %1300 = vdwg.mxu0
        %v1301 = vmax.f32 %v1298, 0.0
        %v1302 = vld [vmem:[%s7] sm:$0xff]
        %v1303 = vld [vmem:[%s7 + $0x8] sm:$0xff]
        %v1304 = vld [vmem:[%s7 + $0x10] sm:$0xff]
        %v1305 = vld [vmem:[%s7 + $0x18] sm:$0xff]
        %v1306 = vld [vmem:[%s7 + $0x20] sm:$0xff]
        %v1307 = vld [vmem:[%s7 + $0x28] sm:$0xff]
        %v1308 = vld [vmem:[%s7 + $0x30] sm:$0xff]
        %v1309 = vld [vmem:[%s7 + $0x38] sm:$0xff]
        %v1310 = vld [vmem:[%s7 + $0x40] sm:$0xff]
        %v1311 = vld [vmem:[%s7 + $0x48] sm:$0xff]
        %v1312 = vld [vmem:[%s7 + $0x50] sm:$0xff]
        %v1313 = vld [vmem:[%s7 + $0x58] sm:$0xff]
        %v1314 = vld [vmem:[%s7 + $0x60] sm:$0xff]
        %v1315 = vld [vmem:[%s7 + $0x68] sm:$0xff]
        %v1316 = vld [vmem:[%s7 + $0x70] sm:$0xff]
        %v1317 = vld [vmem:[%s8] sm:$0x1]
        %v1319 = vlaneseq
        %v1320 = vshrl.u32 %v1319, 7
        %v1321 = vsub.s32 0, %v1320
        %v1322 = vrot.slane %v1317, %v1321
        %vm1324 = vcmask 982016
        %v1326 = vsel %vm1324, %v1301, 0
        %1328 = vmatprep.subr.mxu0 0.0
        %1329 = vmatpush1.msra.mxu0 %v1302
        %1330 = vmatprep.subr.mxu0 0.0
        %1331 = vmatpush1.msra.mxu0 %v1303
        %1332 = vmatprep.subr.mxu0 0.0
        %1333 = vmatpush1.msra.mxu0 %v1304
        %1334 = vmatprep.subr.mxu0 0.0
        %1335 = vmatpush1.msra.mxu0 %v1305
        %1336 = vmatprep.subr.mxu0 0.0
        %1337 = vmatpush1.msra.mxu0 %v1306
        %1338 = vmatprep.subr.mxu0 0.0
        %1339 = vmatpush1.msra.mxu0 %v1307
        %1340 = vmatprep.subr.mxu0 0.0
        %1341 = vmatpush1.msra.mxu0 %v1308
        %1342 = vmatprep.subr.mxu0 0.0
        %1343 = vmatpush1.msra.mxu0 %v1309
        %1344 = vmatprep.subr.mxu0 0.0
        %1345 = vmatpush1.msra.mxu0 %v1310
        %1346 = vmatprep.subr.mxu0 0.0
        %1347 = vmatpush1.msra.mxu0 %v1311
        %1348 = vmatprep.subr.mxu0 0.0
        %1349 = vmatpush1.msra.mxu0 %v1312
        %1350 = vmatprep.subr.mxu0 0.0
        %1351 = vmatpush1.msra.mxu0 %v1313
        %1352 = vmatprep.subr.mxu0 0.0
        %1353 = vmatpush1.msra.mxu0 %v1314
        %1354 = vmatprep.subr.mxu0 0.0
        %1355 = vmatpush1.msra.mxu0 %v1315
        %1356 = vmatprep.subr.mxu0 0.0
        %1357 = vmatpush1.msra.mxu0 %v1316
        %1358 = vmatprep.subr.mxu0 0.0
        %1359 = vmatpush1.msra.mxu0 0.0
        %1360 = vmatprep.subr.mxu0 0.0
        %1361 = vmatpush1.msra.mxu0 0.0
        %1362 = vmatprep.subr.mxu0 0.0
        %1363 = vmatpush1.msra.mxu0 0.0
        %1364 = vmatprep.subr.mxu0 0.0
        %1365 = vmatpush1.msra.mxu0 0.0
        %1366 = vmatprep.subr.mxu0 0.0
        %1367 = vmatpush1.msra.mxu0 0.0
        %1368 = vmatprep.subr.mxu0 0.0
        %1369 = vmatpush1.msra.mxu0 0.0
        %1370 = vmatprep.subr.mxu0 0.0
        %1371 = vmatpush1.msra.mxu0 0.0
        %1372 = vmatprep.subr.mxu0 0.0
        %1373 = vmatpush1.msra.mxu0 0.0
        %1374 = vmatprep.subr.mxu0 0.0
        %1375 = vmatpush1.msra.mxu0 0.0
        %1376 = vmatprep.subr.mxu0 0.0
        %1377 = vmatpush1.msra.mxu0 0.0
        %1378 = vmatprep.subr.mxu0 0.0
        %1379 = vmatpush1.msra.mxu0 0.0
        %1380 = vmatprep.subr.mxu0 0.0
        %1381 = vmatpush1.msra.mxu0 0.0
        %1382 = vmatprep.subr.mxu0 0.0
        %1383 = vmatpush1.msra.mxu0 0.0
        %1384 = vmatprep.subr.mxu0 0.0
        %1385 = vmatpush1.msra.mxu0 0.0
        %1386 = vmatprep.subr.mxu0 0.0
        %1387 = vmatpush1.msra.mxu0 0.0
        %1388 = vmatprep.subr.mxu0 0.0
        %1389 = vmatpush1.msra.mxu0 0.0
        %1390 = vmatprep.subr.mxu0 0.0
        %1391 = vmatpush1.msra.mxu0 0.0
        %1392 = vmatprep.mubr.f32.mxu0 0.0
        %1393 = vmatmul.mubr.f32.gmra.mrb[0].mxu0 %v1326
        %v1394 = vpop.f32.mrb[0].mxu0
        %v1395 = vadd.f32 %v1322, %v1394
        %v1396 = vpop.f32.mrb[0].mxu0
        %1397 = vdwg.mxu0
        %v1398 = vmax.f32 %v1395, 0.0
        %v1399 = vld [vmem:[%s9] sm:$0xff]
        %v1400 = vld [vmem:[%s9 + $0x8] sm:$0xff]
        %v1401 = vld [vmem:[%s9 + $0x10] sm:$0xff]
        %v1402 = vld [vmem:[%s9 + $0x18] sm:$0xff]
        %v1403 = vld [vmem:[%s9 + $0x20] sm:$0xff]
        %v1404 = vld [vmem:[%s9 + $0x28] sm:$0xff]
        %v1405 = vld [vmem:[%s9 + $0x30] sm:$0xff]
        %v1406 = vld [vmem:[%s9 + $0x38] sm:$0xff]
        %v1407 = vld [vmem:[%s9 + $0x40] sm:$0xff]
        %v1408 = vld [vmem:[%s9 + $0x48] sm:$0xff]
        %v1409 = vld [vmem:[%s9 + $0x50] sm:$0xf]
        %v1410 = vld [vmem:[%s10] sm:$0x1]
        %v1412 = vlaneseq
        %v1413 = vshrl.u32 %v1412, 7
        %v1414 = vsub.s32 0, %v1413
        %v1415 = vrot.slane %v1410, %v1414
        %vm1417 = vcmask 687104
        %v1419 = vsel %vm1417, %v1398, 0
        %vm1421 = vcmask 1043456
        %v1423 = vsel %vm1421, %v1409, 0
        %1425 = vmatprep.subr.mxu0 0.0
        %1426 = vmatpush1.msra.mxu0 %v1399
        %1427 = vmatprep.subr.mxu0 0.0
        %1428 = vmatpush1.msra.mxu0 %v1400
        %1429 = vmatprep.subr.mxu0 0.0
        %1430 = vmatpush1.msra.mxu0 %v1401
        %1431 = vmatprep.subr.mxu0 0.0
        %1432 = vmatpush1.msra.mxu0 %v1402
        %1433 = vmatprep.subr.mxu0 0.0
        %1434 = vmatpush1.msra.mxu0 %v1403
        %1435 = vmatprep.subr.mxu0 0.0
        %1436 = vmatpush1.msra.mxu0 %v1404
        %1437 = vmatprep.subr.mxu0 0.0
        %1438 = vmatpush1.msra.mxu0 %v1405
        %1439 = vmatprep.subr.mxu0 0.0
        %1440 = vmatpush1.msra.mxu0 %v1406
        %1441 = vmatprep.subr.mxu0 0.0
        %1442 = vmatpush1.msra.mxu0 %v1407
        %1443 = vmatprep.subr.mxu0 0.0
        %1444 = vmatpush1.msra.mxu0 %v1408
        %1445 = vmatprep.subr.mxu0 0.0
        %1446 = vmatpush1.msra.mxu0 %v1423
        %1447 = vmatprep.subr.mxu0 0.0
        %1448 = vmatpush1.msra.mxu0 0.0
        %1449 = vmatprep.subr.mxu0 0.0
        %1450 = vmatpush1.msra.mxu0 0.0
        %1451 = vmatprep.subr.mxu0 0.0
        %1452 = vmatpush1.msra.mxu0 0.0
        %1453 = vmatprep.subr.mxu0 0.0
        %1454 = vmatpush1.msra.mxu0 0.0
        %1455 = vmatprep.subr.mxu0 0.0
        %1456 = vmatpush1.msra.mxu0 0.0
        %1457 = vmatprep.subr.mxu0 0.0
        %1458 = vmatpush1.msra.mxu0 0.0
        %1459 = vmatprep.subr.mxu0 0.0
        %1460 = vmatpush1.msra.mxu0 0.0
        %1461 = vmatprep.subr.mxu0 0.0
        %1462 = vmatpush1.msra.mxu0 0.0
        %1463 = vmatprep.subr.mxu0 0.0
        %1464 = vmatpush1.msra.mxu0 0.0
        %1465 = vmatprep.subr.mxu0 0.0
        %1466 = vmatpush1.msra.mxu0 0.0
        %1467 = vmatprep.subr.mxu0 0.0
        %1468 = vmatpush1.msra.mxu0 0.0
        %1469 = vmatprep.subr.mxu0 0.0
        %1470 = vmatpush1.msra.mxu0 0.0
        %1471 = vmatprep.subr.mxu0 0.0
        %1472 = vmatpush1.msra.mxu0 0.0
        %1473 = vmatprep.subr.mxu0 0.0
        %1474 = vmatpush1.msra.mxu0 0.0
        %1475 = vmatprep.subr.mxu0 0.0
        %1476 = vmatpush1.msra.mxu0 0.0
        %1477 = vmatprep.subr.mxu0 0.0
        %1478 = vmatpush1.msra.mxu0 0.0
        %1479 = vmatprep.subr.mxu0 0.0
        %1480 = vmatpush1.msra.mxu0 0.0
        %1481 = vmatprep.subr.mxu0 0.0
        %1482 = vmatpush1.msra.mxu0 0.0
        %1483 = vmatprep.subr.mxu0 0.0
        %1484 = vmatpush1.msra.mxu0 0.0
        %1485 = vmatprep.subr.mxu0 0.0
        %1486 = vmatpush1.msra.mxu0 0.0
        %1487 = vmatprep.subr.mxu0 0.0
        %1488 = vmatpush1.msra.mxu0 0.0
        %1489 = vmatprep.mubr.f32.mxu0 0.0
        %1490 = vmatmul.mubr.f32.gmra.mrb[0].mxu0 %v1419
        %v1491 = vpop.f32.mrb[0].mxu0
        %v1492 = vadd.f32 %v1415, %v1491
        %v1493 = vpop.f32.mrb[0].mxu0
        %1494 = vdwg.mxu0
        %vm1495 = vcmask 74752
        %1496 = vst.msk [vmem:[%s394] sm:$0x3] %vm1495, %v1492
        %s1497 = sand.u32 %s270, 1
        %s1498 = scalar_lea.sflag [#allocation4], %s1497
        %s1499 = sand.u32 %s270, 1
        %s1500 = smul.addr %s1499, 2
        %s1501 = scalar_lea.vmem [#allocation5], %s1500
        // Predicated region
        $region69: #{_lambda_.1} parent=63 // pred_check
          %p1502 = pneg %p280
        $region70: #{_lambda_.1} parent=63 // pred_check_branch
          %1504 = sbr.rel (%p1502) target = $region72
        $region71: #{_lambda_.1} parent=63 // pred_region
          %s1506 = ssub.s32 32, 32
          %1507 = vsyncadd %s1498, %s1506
          %s1508 = smul.addr %s26, 32
          %s1509 = scalar_lea.hbm %s11, %s1508
          %s1511 = sshll.u32 %s1501, 4
          %s1512 = int_to_ptr.vmem [resolvable:$true] %s1511
          %1514 = dma.vmem_to_hbm [thread:$0]  %s1512, 32, %s1509, %s1498
        $region72: #{_lambda_.1} parent=63 // pred_fallthru
          _
      $region64: #{_lambda_.1} parent=5 // pred_fallthru
        _
      %p1515 = scmp.le.s32.totalorder 2, %s21
      // Predicated region
      $region73: #{_lambda_.1} parent=5 // pred_check
        %p1516 = pneg %p1515
      $region74: #{_lambda_.1} parent=5 // pred_check_branch
        %1518 = sbr.rel (%p1516) target = $region76
      $region75: #{_lambda_.1} parent=5 // pred_region
        %s1519 = ssub.s32 %s21, 2
        // Predicated region
        $region77: #{_lambda_.1} parent=75 // pred_check
          %p1520 = pneg %p286
        $region78: #{_lambda_.1} parent=75 // pred_check_branch
          %1522 = sbr.rel (%p1520) target = $region80
        $region79: #{_lambda_.1} parent=75 // pred_region
          %s1523 = sand.u32 %s271, 1
          %s1524 = scalar_lea.sflag [#allocation4], %s1523
          %s1525 = sand.u32 %s271, 1
          %s1526 = smul.addr %s1525, 2
          %s1527 = scalar_lea.vmem [#allocation5], %s1526
          %1528 = dma.done %s1524, 32
        $region80: #{_lambda_.1} parent=75 // pred_fallthru
          _
      $region76: #{_lambda_.1} parent=5 // pred_fallthru
        _
    $region6: #{_lambda_.1} parent=1 // loop_footer
      %s25 = sadd.s32 1, %s21
    $region7: #{_lambda_.1} parent=1 // loop_footer_branch
      %20 = sbr.rel target = $region3
    $region8: #{_lambda_.1} parent=1 // loop_exit
      _
    %1529 = vsyncpa [#allocation3], 1
    %s1530 = scalar_lea.sflag [#allocation3], 1
    %1531 = vsyncpa %s1530, 1
    %1532 = vsyncpa [#allocation4], 1
    %s1533 = scalar_lea.sflag [#allocation4], 1
    %1534 = vsyncpa %s1533, 1

</llo_original>
